<compile_context>
chip_gen: v7x
topology: tpu7x:2x2x1
jax: 0.10.0
libtpu: 0.0.40
codegen_flags: <defaults>
</compile_context>

<pallas_src>
import functools

import jax
import jax.numpy as jnp
from jax import lax
from jax.experimental import pallas as pl
from jax.experimental.pallas import tpu as pltpu


def _round_up(x, m):
    return ((x + m - 1) // m) * m


def _conv_in_lrelu_kernel(xp_ref, w_ref, mask_ref, o_ref, sum_ref, ssq_ref, *,
                          K, Wp, stride, TP, WS, P_valid):
    # xp_ref:   (Cin, L)          whole flattened+padded sample (resident across inner axes)
    # w_ref:    (K*K, Cout, Cin)  tap matrices, w_ref[kh*K+kw][o, i] = weight[o, i, kh, kw]
    # mask_ref: (1, TP)           1.0 where this tile's flat position is a real output pixel
    # o_ref:    (Cout, TP)        lane-dense output tile
    # sum_ref, ssq_ref: (Cout, 1) VMEM scratch: per-sample instance-norm accumulators
    pass_id = pl.program_id(1)
    t = pl.program_id(2)

    @pl.when((pass_id == 0) & (t == 0))
    def _zero_stats():
        sum_ref[...] = jnp.zeros_like(sum_ref)
        ssq_ref[...] = jnp.zeros_like(ssq_ref)

    cout = o_ref.shape[0]

    # Start of this tile's input window (multiple of 128 since TP is).
    base = pl.multiple_of(t * (TP * stride), 128)

    if stride == 1:
        # One aligned dynamic load, reused by all K*K taps via static lane-offset slices.
        win = xp_ref[:, pl.ds(base, WS)]                     # (Cin, WS)

        def get_xs(off):
            return win[:, off:off + TP]                      # (Cin, TP)
    else:
        # TODO(synk): stride > 1 path uses per-tap strided loads; not exercised below.
        def get_xs(off):
            return xp_ref[:, pl.ds(base + off, TP, stride=stride)]

    # Direct conv: accumulate K*K shifted matmuls on the MXU (f32 accumulation).
    acc = jnp.zeros((cout, TP), jnp.float32)
    for kh in range(K):
        for kw in range(K):
            xs = get_xs(kh * Wp + kw)
            acc = acc + jnp.dot(w_ref[kh * K + kw], xs,
                                preferred_element_type=jnp.float32)

    m = mask_ref[...]                                        # (1, TP)

    @pl.when(pass_id == 0)
    def _accumulate_stats():
        sum_ref[...] += jnp.sum(acc * m, axis=1, keepdims=True)
        ssq_ref[...] += jnp.sum(acc * acc * m, axis=1, keepdims=True)

    @pl.when(pass_id == 1)
    def _normalize_and_store():
        inv_p = 1.0 / float(P_valid)
        mean = sum_ref[...] * inv_p                          # (Cout, 1)
        var = ssq_ref[...] * inv_p - mean * mean             # biased variance
        scale = lax.rsqrt(var + 1e-5)
        yn = (acc - mean) * scale
        o_ref[...] = jnp.where(yn >= 0, yn, 0.2 * yn).astype(o_ref.dtype)


@functools.partial(jax.jit, static_argnames=("kernel_size", "stride"))
def new_conv_layer(x, weight, bias, *, kernel_size, stride):
    """x: (N, Cin, H, W) NCHW; weight: (Cout, Cin, K, K); bias: (Cout,)."""
    del bias  # exactly cancelled by InstanceNorm's mean subtraction (affine=False)
    N, Cin, H, W = x.shape
    Cout = weight.shape[0]
    K = kernel_size
    s = stride

    # Reflect pad (padding=1) and flatten the padded spatial dims.
    xp = jnp.pad(x, ((0, 0), (0, 0), (1, 1), (1, 1)), mode="reflect")
    Hp, Wp = H + 2, W + 2
    Hout = (Hp - K) // s + 1
    Wout = (Wp - K) // s + 1

    P_flat = Hout * Wp            # output laid out at padded row width (extra cols masked)
    P_valid = Hout * Wout         # true number of output pixels (for mean/var)

    TP = min(1024, _round_up(P_flat, 128))                   # lane tile, multiple of 128
    PT = -(-P_flat // TP)                                    # number of P tiles
    P_out = PT * TP
    halo = _round_up((K - 1) * (Wp + 1) + 1, 128)
    WS = TP * s + halo                                       # in-kernel window size
    L = _round_up(max(Hp * Wp, P_out * s + halo), 128)       # padded flat input length

    xp_flat = jnp.pad(xp.reshape(N, Cin, Hp * Wp),
                      ((0, 0), (0, 0), (0, L - Hp * Wp)))

    # (Cout, Cin, K, K) -> (K*K, Cout, Cin)
    w_r = weight.transpose(2, 3, 0, 1).reshape(K * K, Cout, Cin)

    # Validity mask for the flat (row width Wp) output layout.
    p_idx = jnp.arange(P_out, dtype=jnp.int32)
    mask = (((p_idx % Wp) < Wout) & (p_idx < P_flat)).astype(jnp.float32)
    mask = mask.reshape(1, P_out)

    kernel = functools.partial(_conv_in_lrelu_kernel, K=K, Wp=Wp, stride=s,
                               TP=TP, WS=WS, P_valid=P_valid)

    out_flat = pl.pallas_call(
        kernel,
        out_shape=jax.ShapeDtypeStruct((N, Cout, P_out), jnp.float32),
        grid_spec=pltpu.PrefetchScalarGridSpec(
            num_scalar_prefetch=0,
            grid=(N, 2, PT),                                 # (sample, pass, P tile)
            in_specs=[
                pl.BlockSpec((None, Cin, L), lambda n, p, t: (n, 0, 0)),
                pl.BlockSpec((K * K, Cout, Cin), lambda n, p, t: (0, 0, 0)),
                pl.BlockSpec((1, TP), lambda n, p, t: (0, t)),
            ],
            # Pass 0 parks on block (n,0,0) (never written there); pass 1 writes tile t.
            out_specs=pl.BlockSpec((None, Cout, TP), lambda n, p, t: (n, 0, p * t)),
            scratch_shapes=[pltpu.VMEM((Cout, 1), jnp.float32),
                            pltpu.VMEM((Cout, 1), jnp.float32)],
        ),
        compiler_params=pltpu.CompilerParams(
            dimension_semantics=("parallel", "arbitrary", "arbitrary"),
            vmem_limit_bytes=32 * 1024 * 1024,
        ),
    )(xp_flat, w_r, mask)

    # (N, Cout, P_out) -> (N, Cout, Hout, Wout): drop tile padding and the padded-width
    # garbage columns. Cheap slice/reshape only; no transpose.
    out = out_flat[:, :, :P_flat].reshape(N, Cout, Hout, Wp)[:, :, :, :Wout]
    return out


def _reference(x, weight, bias, kernel_size, stride):
    # Pure-JAX reference (includes the conv bias, which InstanceNorm cancels).
    xp = jnp.pad(x, ((0, 0), (0, 0), (1, 1), (1, 1)), mode="reflect")
    y = lax.conv_general_dilated(
        xp, weight, window_strides=(stride, stride), padding="VALID",
        dimension_numbers=("NCHW", "OIHW", "NCHW"),
    ) + bias.reshape(1, -1, 1, 1)
    mean = jnp.mean(y, axis=(2, 3), keepdims=True)
    var = jnp.mean((y - mean) ** 2, axis=(2, 3), keepdims=True)
    yn = (y - mean) * lax.rsqrt(var + 1e-5)
    return jnp.where(yn >= 0, yn, 0.2 * yn)


if __name__ == "__main__":
    key = jax.random.PRNGKey(0)
    N, Cin, H, W = 2, 4, 16, 16
    Cout, K, stride = 8, 3, 1

    kx, kw, kb = jax.random.split(key, 3)
    x = jax.random.normal(kx, (N, Cin, H, W), dtype=jnp.float32)
    fan_in = Cin * K * K
    bound = 1.0 / (fan_in ** 0.5)
    weight = jax.random.uniform(kw, (Cout, Cin, K, K), jnp.float32, -bound, bound)
    bias = jax.random.uniform(kb, (Cout,), jnp.float32, -bound, bound)

    out = new_conv_layer(x, weight, bias, kernel_size=K, stride=stride)
    out = jax.block_until_ready(out)

    ref = _reference(x, weight, bias, K, stride)
    assert out.shape == ref.shape, (out.shape, ref.shape)
    err = float(jnp.max(jnp.abs(out - ref)))
    assert jnp.allclose(out, ref, atol=1e-4, rtol=1e-4), err

    print("KERNEL_OK")
</pallas_src>

<mosaic_0001>
module attributes {stable_mosaic.version = 11 : i64} {
  func.func @_conv_in_lrelu_kernel(%arg0: i32, %arg1: i32, %arg2: i32, %arg3: memref<1x4x512xf32, #tpu.memory_space<vmem>>, %arg4: memref<9x8x4xf32, #tpu.memory_space<vmem>>, %arg5: memref<1x384xf32, #tpu.memory_space<vmem>>, %arg6: memref<1x8x384xf32, #tpu.memory_space<vmem>>, %arg7: memref<8x1xf32, #tpu.memory_space<vmem>>, %arg8: memref<8x1xf32, #tpu.memory_space<vmem>>) attributes {dimension_semantics = [#tpu.dimension_semantics<parallel>, #tpu.dimension_semantics<arbitrary>, #tpu.dimension_semantics<arbitrary>], iteration_bounds = array<i64: 2, 2, 1>, scalar_prefetch = 0 : i64, scratch_operands = 2 : i64, tpu.core_type = #tpu.core_type<tc>, window_params = [{transform_indices = @transform_0, window_bounds = array<i64: 1, 4, 512>}, {pipeline_mode = #tpu.pipeline_mode<synchronous>, transform_indices = @transform_1, window_bounds = array<i64: 9, 8, 4>}, {transform_indices = @transform_2, window_bounds = array<i64: 1, 384>}, {transform_indices = @transform_3, window_bounds = array<i64: 1, 8, 384>}]} {
    %c0_i32 = arith.constant 0 : i32
    %0 = arith.cmpi eq, %arg1, %c0_i32 : i32
    %c0_i32_0 = arith.constant 0 : i32
    %1 = arith.cmpi eq, %arg2, %c0_i32_0 : i32
    %2 = arith.andi %0, %1 : i1
    %3 = arith.extui %2 : i1 to i32
    %c0_i32_1 = arith.constant 0 : i32
    %4 = arith.cmpi ne, %3, %c0_i32_1 : i32
    scf.if %4 {
      %cst_36 = arith.constant 0.000000e+00 : f32
      %63 = vector.broadcast %cst_36 : f32 to vector<8x1xf32>
      %c0_37 = arith.constant 0 : index
      %c0_38 = arith.constant 0 : index
      %64 = vector.load %arg7[%c0_37, %c0_38] : memref<8x1xf32, #tpu.memory_space<vmem>>, vector<8x1xf32>
      tpu.vector_store %arg7[%c0_37, %c0_38], %63 {strides = array<i32>} : memref<8x1xf32, #tpu.memory_space<vmem>>, vector<8x1xf32>,
      %cst_39 = arith.constant 0.000000e+00 : f32
      %65 = vector.broadcast %cst_39 : f32 to vector<8x1xf32>
      %c0_40 = arith.constant 0 : index
      %c0_41 = arith.constant 0 : index
      %66 = vector.load %arg8[%c0_40, %c0_41] : memref<8x1xf32, #tpu.memory_space<vmem>>, vector<8x1xf32>
      tpu.vector_store %arg8[%c0_40, %c0_41], %65 {strides = array<i32>} : memref<8x1xf32, #tpu.memory_space<vmem>>, vector<8x1xf32>,
    } else {
    }
    %c384_i32 = arith.constant 384 : i32
    %5 = arith.muli %arg2, %c384_i32 : i32
    %6 = tpu.assume_multiple %5, 128 : i32
    %c0 = arith.constant 0 : index
    %c0_2 = arith.constant 0 : index
    %7 = arith.index_cast %6 : i32 to index
    %8 = vector.load %arg3[%c0, %c0_2, %7] : memref<1x4x512xf32, #tpu.memory_space<vmem>>, vector<1x4x512xf32>
    %9 = vector.shape_cast %8 : vector<1x4x512xf32> to vector<4x512xf32>
    %cst = arith.constant 0.000000e+00 : f32
    %10 = vector.broadcast %cst : f32 to vector<8x384xf32>
    %11 = vector.extract_strided_slice %9 {offsets = [0, 0], sizes = [4, 384], strides = [1, 1]} : vector<4x512xf32> to vector<4x384xf32>
    %c0_3 = arith.constant 0 : index
    %c0_4 = arith.constant 0 : index
    %c0_5 = arith.constant 0 : index
    %12 = vector.load %arg4[%c0_3, %c0_4, %c0_5] : memref<9x8x4xf32, #tpu.memory_space<vmem>>, vector<1x8x4xf32>
    %13 = vector.shape_cast %12 : vector<1x8x4xf32> to vector<8x4xf32>
    %cst_6 = arith.constant dense<0.000000e+00> : vector<8x384xf32>
    %14 = tpu.matmul %13, %11, %cst_6 {dimension_numbers = #tpu.dot_dimension_numbers<[1], [0], [0], [1], [0, 0, 1, 1], [], []>} : vector<8x4xf32>, vector<4x384xf32>, vector<8x384xf32> -> vector<8x384xf32>
    %15 = arith.addf %10, %14 : vector<8x384xf32>
    %16 = vector.extract_strided_slice %9 {offsets = [0, 1], sizes = [4, 384], strides = [1, 1]} : vector<4x512xf32> to vector<4x384xf32>
    %c1 = arith.constant 1 : index
    %c0_7 = arith.constant 0 : index
    %c0_8 = arith.constant 0 : index
    %17 = vector.load %arg4[%c1, %c0_7, %c0_8] : memref<9x8x4xf32, #tpu.memory_space<vmem>>, vector<1x8x4xf32>
    %18 = vector.shape_cast %17 : vector<1x8x4xf32> to vector<8x4xf32>
    %cst_9 = arith.constant dense<0.000000e+00> : vector<8x384xf32>
    %19 = tpu.matmul %18, %16, %cst_9 {dimension_numbers = #tpu.dot_dimension_numbers<[1], [0], [0], [1], [0, 0, 1, 1], [], []>} : vector<8x4xf32>, vector<4x384xf32>, vector<8x384xf32> -> vector<8x384xf32>
    %20 = arith.addf %15, %19 : vector<8x384xf32>
    %21 = vector.extract_strided_slice %9 {offsets = [0, 2], sizes = [4, 384], strides = [1, 1]} : vector<4x512xf32> to vector<4x384xf32>
    %c2 = arith.constant 2 : index
    %c0_10 = arith.constant 0 : index
    %c0_11 = arith.constant 0 : index
    %22 = vector.load %arg4[%c2, %c0_10, %c0_11] : memref<9x8x4xf32, #tpu.memory_space<vmem>>, vector<1x8x4xf32>
    %23 = vector.shape_cast %22 : vector<1x8x4xf32> to vector<8x4xf32>
    %cst_12 = arith.constant dense<0.000000e+00> : vector<8x384xf32>
    %24 = tpu.matmul %23, %21, %cst_12 {dimension_numbers = #tpu.dot_dimension_numbers<[1], [0], [0], [1], [0, 0, 1, 1], [], []>} : vector<8x4xf32>, vector<4x384xf32>, vector<8x384xf32> -> vector<8x384xf32>
    %25 = arith.addf %20, %24 : vector<8x384xf32>
    %26 = vector.extract_strided_slice %9 {offsets = [0, 18], sizes = [4, 384], strides = [1, 1]} : vector<4x512xf32> to vector<4x384xf32>
    %c3 = arith.constant 3 : index
    %c0_13 = arith.constant 0 : index
    %c0_14 = arith.constant 0 : index
    %27 = vector.load %arg4[%c3, %c0_13, %c0_14] : memref<9x8x4xf32, #tpu.memory_space<vmem>>, vector<1x8x4xf32>
    %28 = vector.shape_cast %27 : vector<1x8x4xf32> to vector<8x4xf32>
    %cst_15 = arith.constant dense<0.000000e+00> : vector<8x384xf32>
    %29 = tpu.matmul %28, %26, %cst_15 {dimension_numbers = #tpu.dot_dimension_numbers<[1], [0], [0], [1], [0, 0, 1, 1], [], []>} : vector<8x4xf32>, vector<4x384xf32>, vector<8x384xf32> -> vector<8x384xf32>
    %30 = arith.addf %25, %29 : vector<8x384xf32>
    %31 = vector.extract_strided_slice %9 {offsets = [0, 19], sizes = [4, 384], strides = [1, 1]} : vector<4x512xf32> to vector<4x384xf32>
    %c4 = arith.constant 4 : index
    %c0_16 = arith.constant 0 : index
    %c0_17 = arith.constant 0 : index
    %32 = vector.load %arg4[%c4, %c0_16, %c0_17] : memref<9x8x4xf32, #tpu.memory_space<vmem>>, vector<1x8x4xf32>
    %33 = vector.shape_cast %32 : vector<1x8x4xf32> to vector<8x4xf32>
    %cst_18 = arith.constant dense<0.000000e+00> : vector<8x384xf32>
    %34 = tpu.matmul %33, %31, %cst_18 {dimension_numbers = #tpu.dot_dimension_numbers<[1], [0], [0], [1], [0, 0, 1, 1], [], []>} : vector<8x4xf32>, vector<4x384xf32>, vector<8x384xf32> -> vector<8x384xf32>
    %35 = arith.addf %30, %34 : vector<8x384xf32>
    %36 = vector.extract_strided_slice %9 {offsets = [0, 20], sizes = [4, 384], strides = [1, 1]} : vector<4x512xf32> to vector<4x384xf32>
    %c5 = arith.constant 5 : index
    %c0_19 = arith.constant 0 : index
    %c0_20 = arith.constant 0 : index
    %37 = vector.load %arg4[%c5, %c0_19, %c0_20] : memref<9x8x4xf32, #tpu.memory_space<vmem>>, vector<1x8x4xf32>
    %38 = vector.shape_cast %37 : vector<1x8x4xf32> to vector<8x4xf32>
    %cst_21 = arith.constant dense<0.000000e+00> : vector<8x384xf32>
    %39 = tpu.matmul %38, %36, %cst_21 {dimension_numbers = #tpu.dot_dimension_numbers<[1], [0], [0], [1], [0, 0, 1, 1], [], []>} : vector<8x4xf32>, vector<4x384xf32>, vector<8x384xf32> -> vector<8x384xf32>
    %40 = arith.addf %35, %39 : vector<8x384xf32>
    %41 = vector.extract_strided_slice %9 {offsets = [0, 36], sizes = [4, 384], strides = [1, 1]} : vector<4x512xf32> to vector<4x384xf32>
    %c6 = arith.constant 6 : index
    %c0_22 = arith.constant 0 : index
    %c0_23 = arith.constant 0 : index
    %42 = vector.load %arg4[%c6, %c0_22, %c0_23] : memref<9x8x4xf32, #tpu.memory_space<vmem>>, vector<1x8x4xf32>
    %43 = vector.shape_cast %42 : vector<1x8x4xf32> to vector<8x4xf32>
    %cst_24 = arith.constant dense<0.000000e+00> : vector<8x384xf32>
    %44 = tpu.matmul %43, %41, %cst_24 {dimension_numbers = #tpu.dot_dimension_numbers<[1], [0], [0], [1], [0, 0, 1, 1], [], []>} : vector<8x4xf32>, vector<4x384xf32>, vector<8x384xf32> -> vector<8x384xf32>
    %45 = arith.addf %40, %44 : vector<8x384xf32>
    %46 = vector.extract_strided_slice %9 {offsets = [0, 37], sizes = [4, 384], strides = [1, 1]} : vector<4x512xf32> to vector<4x384xf32>
    %c7 = arith.constant 7 : index
    %c0_25 = arith.constant 0 : index
    %c0_26 = arith.constant 0 : index
    %47 = vector.load %arg4[%c7, %c0_25, %c0_26] : memref<9x8x4xf32, #tpu.memory_space<vmem>>, vector<1x8x4xf32>
    %48 = vector.shape_cast %47 : vector<1x8x4xf32> to vector<8x4xf32>
    %cst_27 = arith.constant dense<0.000000e+00> : vector<8x384xf32>
    %49 = tpu.matmul %48, %46, %cst_27 {dimension_numbers = #tpu.dot_dimension_numbers<[1], [0], [0], [1], [0, 0, 1, 1], [], []>} : vector<8x4xf32>, vector<4x384xf32>, vector<8x384xf32> -> vector<8x384xf32>
    %50 = arith.addf %45, %49 : vector<8x384xf32>
    %51 = vector.extract_strided_slice %9 {offsets = [0, 38], sizes = [4, 384], strides = [1, 1]} : vector<4x512xf32> to vector<4x384xf32>
    %c8 = arith.constant 8 : index
    %c0_28 = arith.constant 0 : index
    %c0_29 = arith.constant 0 : index
    %52 = vector.load %arg4[%c8, %c0_28, %c0_29] : memref<9x8x4xf32, #tpu.memory_space<vmem>>, vector<1x8x4xf32>
    %53 = vector.shape_cast %52 : vector<1x8x4xf32> to vector<8x4xf32>
    %cst_30 = arith.constant dense<0.000000e+00> : vector<8x384xf32>
    %54 = tpu.matmul %53, %51, %cst_30 {dimension_numbers = #tpu.dot_dimension_numbers<[1], [0], [0], [1], [0, 0, 1, 1], [], []>} : vector<8x4xf32>, vector<4x384xf32>, vector<8x384xf32> -> vector<8x384xf32>
    %55 = arith.addf %50, %54 : vector<8x384xf32>
    %c0_31 = arith.constant 0 : index
    %c0_32 = arith.constant 0 : index
    %56 = vector.load %arg5[%c0_31, %c0_32] : memref<1x384xf32, #tpu.memory_space<vmem>>, vector<1x384xf32>
    %c0_i32_33 = arith.constant 0 : i32
    %57 = arith.cmpi eq, %arg1, %c0_i32_33 : i32
    %58 = arith.extui %57 : i1 to i32
    %c0_i32_34 = arith.constant 0 : i32
    %59 = arith.cmpi ne, %58, %c0_i32_34 : i32
    scf.if %59 {
      %c0_36 = arith.constant 0 : index
      %c0_37 = arith.constant 0 : index
      %63 = vector.load %arg7[%c0_36, %c0_37] : memref<8x1xf32, #tpu.memory_space<vmem>>, vector<8x1xf32>
      %64 = vector.broadcast %56 : vector<1x384xf32> to vector<8x384xf32>
      %65 = arith.mulf %55, %64 : vector<8x384xf32>
      %cst_38 = arith.constant dense<0.000000e+00> : vector<8xf32>
      %66 = vector.multi_reduction <add>, %65, %cst_38 [1] : vector<8x384xf32> to vector<8xf32>
      %67 = vector.shape_cast %66 : vector<8xf32> to vector<8x1xf32>
      %68 = arith.addf %63, %67 : vector<8x1xf32>
      %c0_39 = arith.constant 0 : index
      %c0_40 = arith.constant 0 : index
      %69 = vector.load %arg7[%c0_39, %c0_40] : memref<8x1xf32, #tpu.memory_space<vmem>>, vector<8x1xf32>
      tpu.vector_store %arg7[%c0_39, %c0_40], %68 {strides = array<i32>} : memref<8x1xf32, #tpu.memory_space<vmem>>, vector<8x1xf32>,
      %c0_41 = arith.constant 0 : index
      %c0_42 = arith.constant 0 : index
      %70 = vector.load %arg8[%c0_41, %c0_42] : memref<8x1xf32, #tpu.memory_space<vmem>>, vector<8x1xf32>
      %71 = arith.mulf %55, %55 : vector<8x384xf32>
      %72 = vector.broadcast %56 : vector<1x384xf32> to vector<8x384xf32>
      %73 = arith.mulf %71, %72 : vector<8x384xf32>
      %cst_43 = arith.constant dense<0.000000e+00> : vector<8xf32>
      %74 = vector.multi_reduction <add>, %73, %cst_43 [1] : vector<8x384xf32> to vector<8xf32>
      %75 = vector.shape_cast %74 : vector<8xf32> to vector<8x1xf32>
      %76 = arith.addf %70, %75 : vector<8x1xf32>
      %c0_44 = arith.constant 0 : index
      %c0_45 = arith.constant 0 : index
      %77 = vector.load %arg8[%c0_44, %c0_45] : memref<8x1xf32, #tpu.memory_space<vmem>>, vector<8x1xf32>
      tpu.vector_store %arg8[%c0_44, %c0_45], %76 {strides = array<i32>} : memref<8x1xf32, #tpu.memory_space<vmem>>, vector<8x1xf32>,
    } else {
    }
    %c1_i32 = arith.constant 1 : i32
    %60 = arith.cmpi eq, %arg1, %c1_i32 : i32
    %61 = arith.extui %60 : i1 to i32
    %c0_i32_35 = arith.constant 0 : i32
    %62 = arith.cmpi ne, %61, %c0_i32_35 : i32
    scf.if %62 {
      %c0_36 = arith.constant 0 : index
      %c0_37 = arith.constant 0 : index
      %63 = vector.load %arg7[%c0_36, %c0_37] : memref<8x1xf32, #tpu.memory_space<vmem>>, vector<8x1xf32>
      %cst_38 = arith.constant 3.906250e-03 : f32
      %64 = vector.broadcast %cst_38 : f32 to vector<8x1xf32>
      %65 = arith.mulf %63, %64 : vector<8x1xf32>
      %c0_39 = arith.constant 0 : index
      %c0_40 = arith.constant 0 : index
      %66 = vector.load %arg8[%c0_39, %c0_40] : memref<8x1xf32, #tpu.memory_space<vmem>>, vector<8x1xf32>
      %cst_41 = arith.constant 3.906250e-03 : f32
      %67 = vector.broadcast %cst_41 : f32 to vector<8x1xf32>
      %68 = arith.mulf %66, %67 : vector<8x1xf32>
      %69 = arith.mulf %65, %65 : vector<8x1xf32>
      %70 = arith.subf %68, %69 : vector<8x1xf32>
      %cst_42 = arith.constant 9.99999974E-6 : f32
      %71 = vector.broadcast %cst_42 : f32 to vector<8x1xf32>
      %72 = arith.addf %70, %71 : vector<8x1xf32>
      %73 = math.rsqrt %72 : vector<8x1xf32>
      %74 = vector.broadcast %65 : vector<8x1xf32> to vector<8x384xf32>
      %75 = arith.subf %55, %74 : vector<8x384xf32>
      %76 = vector.broadcast %73 : vector<8x1xf32> to vector<8x384xf32>
      %77 = arith.mulf %75, %76 : vector<8x384xf32>
      %cst_43 = arith.constant 0.000000e+00 : f32
      %78 = vector.broadcast %cst_43 : f32 to vector<8x384xf32>
      %79 = arith.cmpf oge, %77, %78 : vector<8x384xf32>
      %cst_44 = arith.constant 2.000000e-01 : f32
      %80 = vector.broadcast %cst_44 : f32 to vector<8x384xf32>
      %81 = arith.mulf %80, %77 : vector<8x384xf32>
      %82 = arith.select %79, %77, %81 : vector<8x384xi1>, vector<8x384xf32>
      %c0_45 = arith.constant 0 : index
      %c0_46 = arith.constant 0 : index
      %c0_47 = arith.constant 0 : index
      %83 = vector.load %arg6[%c0_45, %c0_46, %c0_47] : memref<1x8x384xf32, #tpu.memory_space<vmem>>, vector<1x8x384xf32>
      %84 = vector.shape_cast %83 : vector<1x8x384xf32> to vector<8x384xf32>
      %85 = vector.shape_cast %82 : vector<8x384xf32> to vector<1x8x384xf32>
      tpu.vector_store %arg6[%c0_45, %c0_46, %c0_47], %85 {strides = array<i32>} : memref<1x8x384xf32, #tpu.memory_space<vmem>>, vector<1x8x384xf32>,
    } else {
    }
    return
  }
  func.func @transform_0(%arg0: i32, %arg1: i32, %arg2: i32) -> (i32, i32, i32) {
    %c0_i32 = arith.constant 0 : i32
    %c0_i32_0 = arith.constant 0 : i32
    %c0_i32_1 = arith.constant 0 : i32
    return %arg0, %c0_i32, %c0_i32_0 : i32, i32, i32
  }
  func.func @transform_1(%arg0: i32, %arg1: i32, %arg2: i32) -> (i32, i32, i32) {
    %c0_i32 = arith.constant 0 : i32
    %c0_i32_0 = arith.constant 0 : i32
    %c0_i32_1 = arith.constant 0 : i32
    %c0_i32_2 = arith.constant 0 : i32
    return %c0_i32, %c0_i32_0, %c0_i32_1 : i32, i32, i32
  }
  func.func @transform_2(%arg0: i32, %arg1: i32, %arg2: i32) -> (i32, i32) {
    %c0_i32 = arith.constant 0 : i32
    %c0_i32_0 = arith.constant 0 : i32
    return %c0_i32, %arg2 : i32, i32
  }
  func.func @transform_3(%arg0: i32, %arg1: i32, %arg2: i32) -> (i32, i32, i32) {
    %0 = arith.muli %arg1, %arg2 : i32
    %c0_i32 = arith.constant 0 : i32
    %c0_i32_0 = arith.constant 0 : i32
    return %arg0, %c0_i32, %0 : i32, i32, i32
  }
}

</mosaic_0001>

<llo_original>
// kernel: new_conv_layer.1
$region0: #{new_conv_layer.1}
  #allocation0 [shape = 'u32[]', space=smem, size = 0x4, offset = 0x4, fixed_abs, tag = 'smem constant byte address 0x4 - core index']
  #allocation1 [shape = 'u32[144,128]{1,0:T(1,128)}', space=vmem, size = 0x12000, scoped, tag = 'internal scratch']
  #allocation2 [shape = 'f32[8,1]{1,0:T(8,128)}', space=vmem, size = 0x1000, scoped, tag = 'scratch operand']
  #allocation3 [shape = 'f32[8,1]{1,0:T(8,128)}', space=vmem, size = 0x1000, scoped, tag = 'scratch operand']
  %s0 = inlined_call_operand.vmem [shape: f32[2,4,512], index: 0, kind: input, shape index: {}]
  %s1 = inlined_call_operand.vmem [shape: f32[9,8,4], index: 1, kind: input, shape index: {}]
  %s2 = inlined_call_operand.vmem [shape: f32[1,384], index: 2, kind: input, shape index: {}]
  %s3 = inlined_call_operand.vmem [shape: f32[2,8,384], index: 3, kind: output, shape index: {}]
  %s4 = sld [smem:[#allocation0]]
  $region57: #{new_conv_layer.1} parent=0
    _
  %s6 = ssub.s32 1, %s4
  %s7 = scalar_select 0, %s6, %s4
  loop: start=0, step=1, limit=6
  $region2: #{new_conv_layer.1} parent=0 // loop_pre_header
    _
  $region3: #{new_conv_layer.1} parent=0 // loop_header
    %s9 = sphi 0, %s13
    %p10 = scmp.ge.s32.totalorder %s9, 6
    %s16 = sphi 0, %s35
    %s17 = sphi 0, %s31
    %s18 = sphi 0, %s27
    %s19 = sphi 0, %s16
    %s20 = sphi 0, %s17
    %s21 = sphi 0, %s18
    %s22 = sphi 0, %s19
    %s23 = sphi 0, %s20
    %s24 = sphi 0, %s21
    %s38 = sphi 0, %s40
    %s41 = sphi 0, %s38
    %s42 = sphi 0, %s41
    %s58 = sphi 0, %s42
    %s62 = sphi 0, %s62
    %s64 = sphi 0, %s62
    %s65 = sphi 0, %s64
    %s79 = sphi 0, %s65
    %s85 = sphi 0, %s87
    %s88 = sphi 0, %s85
    %s89 = sphi 0, %s88
    %s105 = sphi 0, %s89
    %s115 = sphi 0, %s117
    %s118 = sphi 0, %s115
    %s119 = sphi 0, %s118
    %s135 = sphi 0, %s119
  $region4: #{new_conv_layer.1} parent=0 // loop_header_branch
    %12 = sbr.rel (%p10) target = $region8
  $region5: #{new_conv_layer.1} parent=0 // loop_body
    %s14 = ssub.s32 %s9, 1
    %s15 = ssub.s32 %s9, 2
    %s25 = sadd.s32 1, %s18
    %p26 = scmp.ge.s32.totalorder %s25, 1
    %s27 = scalar_select %p26, 0, %s25
    %s28 = sadd.s32 1, %s17
    %s29 = scalar_select %p26, %s28, %s17
    %p30 = scmp.ge.s32.totalorder %s29, 2
    %s31 = scalar_select %p30, 0, %s29
    %s32 = sadd.s32 1, %s16
    %s33 = scalar_select %p30, %s32, %s16
    %p34 = scmp.ge.s32.totalorder %s33, 2
    %s35 = scalar_select %p34, 0, %s33
    %s36 = ssub.s32 %s16, %s35
    %p37 = scmp.eq.s32.totalorder %s36, 0
    %s39 = sadd.s32 %s38, 1
    %s40 = scalar_select %p37, %s38, %s39
    %p43 = pneg %p37
    %p44 = scmp.eq.s32.totalorder %s9, 3
    %p45 = por %p43, %p44
    %p46 = scmp.ne.s32.totalorder %s38, %s41
    %p47 = scmp.eq.s32.totalorder %s9, 0
    %p48 = por %p46, %p47
    %p49 = scmp.ne.s32.totalorder %s38, %s41
    %p50 = scmp.eq.s32.totalorder %s14, 3
    %p51 = por %p49, %p50
    %p52 = scmp.ne.s32.totalorder %s41, %s42
    %p53 = scmp.eq.s32.totalorder %s14, 0
    %p54 = por %p52, %p53
    %p55 = scmp.ne.s32.totalorder %s41, %s42
    %p56 = scmp.eq.s32.totalorder %s15, 3
    %p57 = por %p55, %p56
    %p59 = scmp.ne.s32.totalorder %s42, %s58
    %p60 = scmp.eq.s32.totalorder %s15, 0
    %p61 = por %p59, %p60
    %s63 = sadd.s32 %s62, 1
    %p66 = scmp.eq.s32.totalorder %s9, 3
    %p67 = scmp.ne.s32.totalorder %s62, %s64
    %p68 = scmp.eq.s32.totalorder %s9, 0
    %p69 = por %p67, %p68
    %p70 = scmp.ne.s32.totalorder %s62, %s64
    %p71 = scmp.eq.s32.totalorder %s14, 3
    %p72 = por %p70, %p71
    %p73 = scmp.ne.s32.totalorder %s64, %s65
    %p74 = scmp.eq.s32.totalorder %s14, 0
    %p75 = por %p73, %p74
    %p76 = scmp.ne.s32.totalorder %s64, %s65
    %p77 = scmp.eq.s32.totalorder %s15, 3
    %p78 = por %p76, %p77
    %p80 = scmp.ne.s32.totalorder %s65, %s79
    %p81 = scmp.eq.s32.totalorder %s15, 0
    %p82 = por %p80, %p81
    %s83 = ssub.s32 %s18, %s27
    %p84 = scmp.eq.s32.totalorder %s83, 0
    %s86 = sadd.s32 %s85, 1
    %s87 = scalar_select %p84, %s85, %s86
    %p90 = pneg %p84
    %p91 = scmp.eq.s32.totalorder %s9, 3
    %p92 = por %p90, %p91
    %p93 = scmp.ne.s32.totalorder %s85, %s88
    %p94 = scmp.eq.s32.totalorder %s9, 0
    %p95 = por %p93, %p94
    %p96 = scmp.ne.s32.totalorder %s85, %s88
    %p97 = scmp.eq.s32.totalorder %s14, 3
    %p98 = por %p96, %p97
    %p99 = scmp.ne.s32.totalorder %s88, %s89
    %p100 = scmp.eq.s32.totalorder %s14, 0
    %p101 = por %p99, %p100
    %p102 = scmp.ne.s32.totalorder %s88, %s89
    %p103 = scmp.eq.s32.totalorder %s15, 3
    %p104 = por %p102, %p103
    %p106 = scmp.ne.s32.totalorder %s89, %s105
    %p107 = scmp.eq.s32.totalorder %s15, 0
    %p108 = por %p106, %p107
    %s109 = smul.u32 %s17, %s18
    %s110 = smul.u32 %s31, %s27
    %s111 = ssub.s32 %s16, %s35
    %s112 = ssub.s32 %s109, %s110
    %s113 = sor.u32 %s111, %s112
    %p114 = scmp.eq.s32.totalorder %s113, 0
    %s116 = sadd.s32 %s115, 1
    %s117 = scalar_select %p114, %s115, %s116
    %p120 = pneg %p114
    %p121 = scmp.eq.s32.totalorder %s9, 3
    %p122 = por %p120, %p121
    %p123 = scmp.ne.s32.totalorder %s115, %s118
    %p124 = scmp.eq.s32.totalorder %s9, 0
    %p125 = por %p123, %p124
    %p126 = scmp.ne.s32.totalorder %s115, %s118
    %p127 = scmp.eq.s32.totalorder %s14, 3
    %p128 = por %p126, %p127
    %p129 = scmp.ne.s32.totalorder %s118, %s119
    %p130 = scmp.eq.s32.totalorder %s14, 0
    %p131 = por %p129, %p130
    %p132 = scmp.ne.s32.totalorder %s118, %s119
    %p133 = scmp.eq.s32.totalorder %s15, 3
    %p134 = por %p132, %p133
    %p136 = scmp.ne.s32.totalorder %s119, %s135
    %p137 = scmp.eq.s32.totalorder %s15, 0
    %p138 = por %p136, %p137
    %p139 = scmp.le.s32.totalorder 1, %s9
    %p140 = scmp.lt.s32.totalorder %s9, 5
    %p141 = pnand %p139, %p140
    %p142 = pneg %p141
    // Predicated region
    $region9: #{new_conv_layer.1} parent=5 // pred_check
      _
    $region10: #{new_conv_layer.1} parent=5 // pred_check_branch
      %144 = sbr.rel (%p141) target = $region12
    $region11: #{new_conv_layer.1} parent=5 // pred_region
      %s145 = ssub.s32 %s9, 1
      // Predicated region
      $region13: #{new_conv_layer.1} parent=11 // pred_check
        %p146 = pneg %p75
      $region14: #{new_conv_layer.1} parent=11 // pred_check_branch
        %148 = sbr.rel (%p146) target = $region16
      $region15: #{new_conv_layer.1} parent=11 // pred_region
        _
      $region16: #{new_conv_layer.1} parent=11 // pred_fallthru
        _
      // Predicated region
      $region17: #{new_conv_layer.1} parent=11 // pred_check
        %p149 = pneg %p101
      $region18: #{new_conv_layer.1} parent=11 // pred_check_branch
        %151 = sbr.rel (%p149) target = $region20
      $region19: #{new_conv_layer.1} parent=11 // pred_region
        %s152 = smul.u32 3, %s21
        %p153 = scmp.lt.s32.totalorder %s152, 2
        %s154 = scalar_select %p153, %s152, 2
        %s155 = scalar_lea.vmem %s2, %s154
        %s156 = smul.u32 3, %s21
      $region20: #{new_conv_layer.1} parent=11 // pred_fallthru
        _
    $region12: #{new_conv_layer.1} parent=5 // pred_fallthru
      _
    %p157 = scmp.lt.s32.totalorder %s9, 4
    // Predicated region
    $region21: #{new_conv_layer.1} parent=5 // pred_check
      %p158 = pneg %p157
    $region22: #{new_conv_layer.1} parent=5 // pred_check_branch
      %160 = sbr.rel (%p158) target = $region24
    $region23: #{new_conv_layer.1} parent=5 // pred_region
      // Predicated region
      $region25: #{new_conv_layer.1} parent=23 // pred_check
        %p161 = pneg %p48
      $region26: #{new_conv_layer.1} parent=23 // pred_check_branch
        %163 = sbr.rel (%p161) target = $region28
      $region27: #{new_conv_layer.1} parent=23 // pred_region
        %p164 = scmp.lt.s32.totalorder %s16, 1
        %s165 = scalar_select %p164, %s16, 1
        %s166 = smul.addr %s165, 4
        %s167 = smul.addr %s166, 4
        %s168 = scalar_lea.vmem %s0, %s167
      $region28: #{new_conv_layer.1} parent=23 // pred_fallthru
        _
    $region24: #{new_conv_layer.1} parent=5 // pred_fallthru
      _
    %p169 = scmp.le.s32.totalorder 1, %s9
    %p170 = scmp.lt.s32.totalorder %s9, 5
    %p171 = pnand %p169, %p170
    %p172 = pneg %p171
    // Predicated region
    $region29: #{new_conv_layer.1} parent=5 // pred_check
      _
    $region30: #{new_conv_layer.1} parent=5 // pred_check_branch
      %174 = sbr.rel (%p171) target = $region32
    $region31: #{new_conv_layer.1} parent=5 // pred_region
      %s175 = ssub.s32 %s9, 1
      %p176 = scmp.lt.s32.totalorder %s19, 1
      %s177 = scalar_select %p176, %s19, 1
      %s178 = smul.addr %s177, 4
      %s179 = smul.addr %s178, 4
      %s180 = scalar_lea.vmem %s0, %s179
      %p181 = pneg %p54
      %p182 = pneg %p51
      %p183 = pneg %p75
      %p184 = pneg %p72
      %s185 = smul.u32 3, %s21
      %p186 = scmp.lt.s32.totalorder %s185, 2
      %s187 = scalar_select %p186, %s185, 2
      %s188 = scalar_lea.vmem %s2, %s187
      %p189 = pneg %p101
      %p190 = pneg %p98
      %p191 = pneg %p131
      %p192 = pneg %p128
      %s193 = smul.u32 %s20, %s21
      %s194 = smul.u32 3, %s193
      %p195 = scmp.lt.s32.totalorder %s19, 1
      %s196 = scalar_select %p195, %s19, 1
      %p197 = scmp.lt.s32.totalorder %s194, 2
      %s198 = scalar_select %p197, %s194, 2
      %s199 = smul.addr %s196, 3
      %s200 = sadd.s32 %s198, %s199
      %s201 = smul.addr %s200, 8
      %s202 = scalar_lea.vmem %s3, %s201
      %p203 = scmp.lt.s32.totalorder %s19, 1
      %s204 = scalar_select %p203, %s19, 1
      %s205 = smul.addr %s204, 4
      %s206 = smul.addr %s205, 4
      %s207 = scalar_lea.vmem %s0, %s206
      %s208 = smul.u32 3, %s21
      %p209 = scmp.lt.s32.totalorder %s208, 2
      %s210 = scalar_select %p209, %s208, 2
      %s211 = scalar_lea.vmem %s2, %s210
      %s212 = smul.u32 3, %s21
      %s213 = smul.u32 %s20, %s21
      %s214 = smul.u32 3, %s213
      %p215 = scmp.lt.s32.totalorder %s19, 1
      %s216 = scalar_select %p215, %s19, 1
      %p217 = scmp.lt.s32.totalorder %s214, 2
      %s218 = scalar_select %p217, %s214, 2
      %s219 = smul.addr %s216, 3
      %s220 = sadd.s32 %s218, %s219
      %s221 = smul.addr %s220, 8
      %s222 = scalar_lea.vmem %s3, %s221
      %s223 = smul.u32 %s20, %s21
      %s224 = smul.u32 3, %s223
      %p225 = scmp.eq.s32.totalorder %s20, 0
      %p226 = scmp.eq.s32.totalorder %s21, 0
      %p227 = pnand %p225, %p226
      %p228 = pneg %p227
      // Predicated region
      $region33: #{new_conv_layer.1} parent=31 // pred_check
        _
      $region34: #{new_conv_layer.1} parent=31 // pred_check_branch
        %230 = sbr.rel (%p227) target = $region36
      $region35: #{new_conv_layer.1} parent=31 // pred_region
        %vm231 = vcmask 7168
        %232 = vst.msk [vmem:[#allocation2] sm:$0xff] %vm231, 0.0
        %233 = vst.msk [vmem:[#allocation3] sm:$0xff] %vm231, 0.0
      $region36: #{new_conv_layer.1} parent=31 // pred_fallthru
        _
      %s234 = smul.u32 %s21, 384
      %s235 = sshra.s32 %s234, 7
      %s236 = sand.u32 %s234, 127
      %s237 = smul.addr %s235, 4
      %s238 = scalar_lea.vmem %s207, %s237
      %v239 = vld [vmem:[%s238] sm:$0xff]
      %v240 = vld [vmem:[%s238 + $0x8] sm:$0xff]
      %v241 = vld [vmem:[%s1] sm:$0xff]
      %s242 = scalar_lea.vmem %s1, 8
      %v243 = vld [vmem:[%s242] sm:$0xff]
      %v246 = vcombine.high %v239, %v239
      %v247 = vcombine.high %v240, %v240
      %248 = vrot.lane.b32.xlu0 %v239, 127
      %v249 = vpop.permute.xlu0 %248
      %250 = vrot.lane.b32.xlu0 %v246, 127
      %v251 = vpop.permute.xlu0 %250
      %252 = vrot.lane.b32.xlu0 %v240, 127
      %v253 = vpop.permute.xlu0 %252
      %254 = vrot.lane.b32.xlu0 %v247, 127
      %v255 = vpop.permute.xlu0 %254
      %vm256 = vcmask 1039360
      %v257 = vsel %vm256, %v249, %v251
      %v258 = vsel %vm256, %v251, %v253
      %v259 = vsel %vm256, %v253, %v255
      %vm260 = vcmask 31744
      %v262 = vsel %vm260, %v243, 0
      %vm264 = vcmask 1043456
      %v265 = vsel %vm264, %v257, 0
      %v267 = vsel %vm264, %v258, 0
      %v269 = vsel %vm264, %v259, 0
      %271 = vmatprep.subr.mxu0 %v267
      %272 = vmatpush1.msra.mxu0 %v265
      %273 = vmatprep.subr.mxu0 0.0
      %274 = vmatpush1.msra.mxu0 0.0
      %275 = vmatprep.subr.mxu0 0.0
      %276 = vmatpush1.msra.mxu0 0.0
      %277 = vmatprep.subr.mxu0 0.0
      %278 = vmatpush1.msra.mxu0 0.0
      %279 = vmatprep.subr.mxu0 0.0
      %280 = vmatpush1.msra.mxu0 0.0
      %281 = vmatprep.subr.mxu0 0.0
      %282 = vmatpush1.msra.mxu0 0.0
      %283 = vmatprep.subr.mxu0 0.0
      %284 = vmatpush1.msra.mxu0 0.0
      %285 = vmatprep.subr.mxu0 0.0
      %286 = vmatpush1.msra.mxu0 0.0
      %287 = vmatprep.subr.mxu0 0.0
      %288 = vmatpush1.msra.mxu0 0.0
      %289 = vmatprep.subr.mxu0 0.0
      %290 = vmatpush1.msra.mxu0 0.0
      %291 = vmatprep.subr.mxu0 0.0
      %292 = vmatpush1.msra.mxu0 0.0
      %293 = vmatprep.subr.mxu0 0.0
      %294 = vmatpush1.msra.mxu0 0.0
      %295 = vmatprep.subr.mxu0 0.0
      %296 = vmatpush1.msra.mxu0 0.0
      %297 = vmatprep.subr.mxu0 0.0
      %298 = vmatpush1.msra.mxu0 0.0
      %299 = vmatprep.subr.mxu0 0.0
      %300 = vmatpush1.msra.mxu0 0.0
      %301 = vmatprep.subr.mxu0 0.0
      %302 = vmatpush1.msra.mxu0 0.0
      %303 = vmatprep.subr.mxu0 0.0
      %304 = vmatpush1.msra.mxu0 0.0
      %305 = vmatprep.subr.mxu0 0.0
      %306 = vmatpush1.msra.mxu0 0.0
      %307 = vmatprep.subr.mxu0 0.0
      %308 = vmatpush1.msra.mxu0 0.0
      %309 = vmatprep.subr.mxu0 0.0
      %310 = vmatpush1.msra.mxu0 0.0
      %311 = vmatprep.subr.mxu0 0.0
      %312 = vmatpush1.msra.mxu0 0.0
      %313 = vmatprep.subr.mxu0 0.0
      %314 = vmatpush1.msra.mxu0 0.0
      %315 = vmatprep.subr.mxu0 0.0
      %316 = vmatpush1.msra.mxu0 0.0
      %317 = vmatprep.subr.mxu0 0.0
      %318 = vmatpush1.msra.mxu0 0.0
      %319 = vmatprep.subr.mxu0 0.0
      %320 = vmatpush1.msra.mxu0 0.0
      %321 = vmatprep.subr.mxu0 0.0
      %322 = vmatpush1.msra.mxu0 0.0
      %323 = vmatprep.subr.mxu0 0.0
      %324 = vmatpush1.msra.mxu0 0.0
      %325 = vmatprep.subr.mxu0 0.0
      %326 = vmatpush1.msra.mxu0 0.0
      %327 = vmatprep.subr.mxu0 0.0
      %328 = vmatpush1.msra.mxu0 0.0
      %329 = vmatprep.subr.mxu0 0.0
      %330 = vmatpush1.msra.mxu0 0.0
      %331 = vmatprep.subr.mxu0 0.0
      %332 = vmatpush1.msra.mxu0 0.0
      %333 = vmatprep.subr.mxu0 0.0
      %334 = vmatpush1.msra.mxu0 0.0
      %335 = vmatprep.mubr.f32.mxu0 0.0
      %336 = vmatmul.mubr.f32.gmra.mrb[0].mxu0 %v262
      %v337 = vpop.f32.mrb[0].mxu0
      %v338 = vadd.f32 0.0, %v337
      %v339 = vpop.f32.mrb[0].mxu0
      %v340 = vadd.f32 0.0, %v339
      %341 = vdwg.mxu0
      %342 = vmatprep.subr.mxu0 0.0
      %343 = vmatpush1.msra.mxu0 %v269
      %344 = vmatprep.subr.mxu0 0.0
      %345 = vmatpush1.msra.mxu0 0.0
      %346 = vmatprep.subr.mxu0 0.0
      %347 = vmatpush1.msra.mxu0 0.0
      %348 = vmatprep.subr.mxu0 0.0
      %349 = vmatpush1.msra.mxu0 0.0
      %350 = vmatprep.subr.mxu0 0.0
      %351 = vmatpush1.msra.mxu0 0.0
      %352 = vmatprep.subr.mxu0 0.0
      %353 = vmatpush1.msra.mxu0 0.0
      %354 = vmatprep.subr.mxu0 0.0
      %355 = vmatpush1.msra.mxu0 0.0
      %356 = vmatprep.subr.mxu0 0.0
      %357 = vmatpush1.msra.mxu0 0.0
      %358 = vmatprep.subr.mxu0 0.0
      %359 = vmatpush1.msra.mxu0 0.0
      %360 = vmatprep.subr.mxu0 0.0
      %361 = vmatpush1.msra.mxu0 0.0
      %362 = vmatprep.subr.mxu0 0.0
      %363 = vmatpush1.msra.mxu0 0.0
      %364 = vmatprep.subr.mxu0 0.0
      %365 = vmatpush1.msra.mxu0 0.0
      %366 = vmatprep.subr.mxu0 0.0
      %367 = vmatpush1.msra.mxu0 0.0
      %368 = vmatprep.subr.mxu0 0.0
      %369 = vmatpush1.msra.mxu0 0.0
      %370 = vmatprep.subr.mxu0 0.0
      %371 = vmatpush1.msra.mxu0 0.0
      %372 = vmatprep.subr.mxu0 0.0
      %373 = vmatpush1.msra.mxu0 0.0
      %374 = vmatprep.subr.mxu0 0.0
      %375 = vmatpush1.msra.mxu0 0.0
      %376 = vmatprep.subr.mxu0 0.0
      %377 = vmatpush1.msra.mxu0 0.0
      %378 = vmatprep.subr.mxu0 0.0
      %379 = vmatpush1.msra.mxu0 0.0
      %380 = vmatprep.subr.mxu0 0.0
      %381 = vmatpush1.msra.mxu0 0.0
      %382 = vmatprep.subr.mxu0 0.0
      %383 = vmatpush1.msra.mxu0 0.0
      %384 = vmatprep.subr.mxu0 0.0
      %385 = vmatpush1.msra.mxu0 0.0
      %386 = vmatprep.subr.mxu0 0.0
      %387 = vmatpush1.msra.mxu0 0.0
      %388 = vmatprep.subr.mxu0 0.0
      %389 = vmatpush1.msra.mxu0 0.0
      %390 = vmatprep.subr.mxu0 0.0
      %391 = vmatpush1.msra.mxu0 0.0
      %392 = vmatprep.subr.mxu0 0.0
      %393 = vmatpush1.msra.mxu0 0.0
      %394 = vmatprep.subr.mxu0 0.0
      %395 = vmatpush1.msra.mxu0 0.0
      %396 = vmatprep.subr.mxu0 0.0
      %397 = vmatpush1.msra.mxu0 0.0
      %398 = vmatprep.subr.mxu0 0.0
      %399 = vmatpush1.msra.mxu0 0.0
      %400 = vmatprep.subr.mxu0 0.0
      %401 = vmatpush1.msra.mxu0 0.0
      %402 = vmatprep.subr.mxu0 0.0
      %403 = vmatpush1.msra.mxu0 0.0
      %404 = vmatprep.subr.mxu0 0.0
      %405 = vmatpush1.msra.mxu0 0.0
      %406 = vmatprep.mubr.f32.mxu0 0.0
      %407 = vmatmul.mubr.f32.gmra.mrb[0].mxu0 %v262
      %v408 = vpop.f32.mrb[0].mxu0
      %v409 = vadd.f32 0.0, %v408
      %v410 = vpop.f32.mrb[0].mxu0
      %411 = vdwg.mxu0
      %v413 = vsel %vm260, %v241, 0
      %v415 = vsel %vm264, %v239, 0
      %v417 = vsel %vm264, %v246, 0
      %v419 = vsel %vm264, %v240, 0
      %421 = vmatprep.subr.mxu0 %v417
      %422 = vmatpush1.msra.mxu0 %v415
      %423 = vmatprep.subr.mxu0 0.0
      %424 = vmatpush1.msra.mxu0 0.0
      %425 = vmatprep.subr.mxu0 0.0
      %426 = vmatpush1.msra.mxu0 0.0
      %427 = vmatprep.subr.mxu0 0.0
      %428 = vmatpush1.msra.mxu0 0.0
      %429 = vmatprep.subr.mxu0 0.0
      %430 = vmatpush1.msra.mxu0 0.0
      %431 = vmatprep.subr.mxu0 0.0
      %432 = vmatpush1.msra.mxu0 0.0
      %433 = vmatprep.subr.mxu0 0.0
      %434 = vmatpush1.msra.mxu0 0.0
      %435 = vmatprep.subr.mxu0 0.0
      %436 = vmatpush1.msra.mxu0 0.0
      %437 = vmatprep.subr.mxu0 0.0
      %438 = vmatpush1.msra.mxu0 0.0
      %439 = vmatprep.subr.mxu0 0.0
      %440 = vmatpush1.msra.mxu0 0.0
      %441 = vmatprep.subr.mxu0 0.0
      %442 = vmatpush1.msra.mxu0 0.0
      %443 = vmatprep.subr.mxu0 0.0
      %444 = vmatpush1.msra.mxu0 0.0
      %445 = vmatprep.subr.mxu0 0.0
      %446 = vmatpush1.msra.mxu0 0.0
      %447 = vmatprep.subr.mxu0 0.0
      %448 = vmatpush1.msra.mxu0 0.0
      %449 = vmatprep.subr.mxu0 0.0
      %450 = vmatpush1.msra.mxu0 0.0
      %451 = vmatprep.subr.mxu0 0.0
      %452 = vmatpush1.msra.mxu0 0.0
      %453 = vmatprep.subr.mxu0 0.0
      %454 = vmatpush1.msra.mxu0 0.0
      %455 = vmatprep.subr.mxu0 0.0
      %456 = vmatpush1.msra.mxu0 0.0
      %457 = vmatprep.subr.mxu0 0.0
      %458 = vmatpush1.msra.mxu0 0.0
      %459 = vmatprep.subr.mxu0 0.0
      %460 = vmatpush1.msra.mxu0 0.0
      %461 = vmatprep.subr.mxu0 0.0
      %462 = vmatpush1.msra.mxu0 0.0
      %463 = vmatprep.subr.mxu0 0.0
      %464 = vmatpush1.msra.mxu0 0.0
      %465 = vmatprep.subr.mxu0 0.0
      %466 = vmatpush1.msra.mxu0 0.0
      %467 = vmatprep.subr.mxu0 0.0
      %468 = vmatpush1.msra.mxu0 0.0
      %469 = vmatprep.subr.mxu0 0.0
      %470 = vmatpush1.msra.mxu0 0.0
      %471 = vmatprep.subr.mxu0 0.0
      %472 = vmatpush1.msra.mxu0 0.0
      %473 = vmatprep.subr.mxu0 0.0
      %474 = vmatpush1.msra.mxu0 0.0
      %475 = vmatprep.subr.mxu0 0.0
      %476 = vmatpush1.msra.mxu0 0.0
      %477 = vmatprep.subr.mxu0 0.0
      %478 = vmatpush1.msra.mxu0 0.0
      %479 = vmatprep.subr.mxu0 0.0
      %480 = vmatpush1.msra.mxu0 0.0
      %481 = vmatprep.subr.mxu0 0.0
      %482 = vmatpush1.msra.mxu0 0.0
      %483 = vmatprep.subr.mxu0 0.0
      %484 = vmatpush1.msra.mxu0 0.0
      %485 = vmatprep.mubr.f32.mxu0 0.0
      %486 = vmatmul.mubr.f32.gmra.mrb[0].mxu0 %v413
      %v487 = vpop.f32.mrb[0].mxu0
      %v488 = vadd.f32 %v338, %v487
      %v489 = vpop.f32.mrb[0].mxu0
      %v490 = vadd.f32 %v340, %v489
      %491 = vdwg.mxu0
      %492 = vmatprep.subr.mxu0 0.0
      %493 = vmatpush1.msra.mxu0 %v419
      %494 = vmatprep.subr.mxu0 0.0
      %495 = vmatpush1.msra.mxu0 0.0
      %496 = vmatprep.subr.mxu0 0.0
      %497 = vmatpush1.msra.mxu0 0.0
      %498 = vmatprep.subr.mxu0 0.0
      %499 = vmatpush1.msra.mxu0 0.0
      %500 = vmatprep.subr.mxu0 0.0
      %501 = vmatpush1.msra.mxu0 0.0
      %502 = vmatprep.subr.mxu0 0.0
      %503 = vmatpush1.msra.mxu0 0.0
      %504 = vmatprep.subr.mxu0 0.0
      %505 = vmatpush1.msra.mxu0 0.0
      %506 = vmatprep.subr.mxu0 0.0
      %507 = vmatpush1.msra.mxu0 0.0
      %508 = vmatprep.subr.mxu0 0.0
      %509 = vmatpush1.msra.mxu0 0.0
      %510 = vmatprep.subr.mxu0 0.0
      %511 = vmatpush1.msra.mxu0 0.0
      %512 = vmatprep.subr.mxu0 0.0
      %513 = vmatpush1.msra.mxu0 0.0
      %514 = vmatprep.subr.mxu0 0.0
      %515 = vmatpush1.msra.mxu0 0.0
      %516 = vmatprep.subr.mxu0 0.0
      %517 = vmatpush1.msra.mxu0 0.0
      %518 = vmatprep.subr.mxu0 0.0
      %519 = vmatpush1.msra.mxu0 0.0
      %520 = vmatprep.subr.mxu0 0.0
      %521 = vmatpush1.msra.mxu0 0.0
      %522 = vmatprep.subr.mxu0 0.0
      %523 = vmatpush1.msra.mxu0 0.0
      %524 = vmatprep.subr.mxu0 0.0
      %525 = vmatpush1.msra.mxu0 0.0
      %526 = vmatprep.subr.mxu0 0.0
      %527 = vmatpush1.msra.mxu0 0.0
      %528 = vmatprep.subr.mxu0 0.0
      %529 = vmatpush1.msra.mxu0 0.0
      %530 = vmatprep.subr.mxu0 0.0
      %531 = vmatpush1.msra.mxu0 0.0
      %532 = vmatprep.subr.mxu0 0.0
      %533 = vmatpush1.msra.mxu0 0.0
      %534 = vmatprep.subr.mxu0 0.0
      %535 = vmatpush1.msra.mxu0 0.0
      %536 = vmatprep.subr.mxu0 0.0
      %537 = vmatpush1.msra.mxu0 0.0
      %538 = vmatprep.subr.mxu0 0.0
      %539 = vmatpush1.msra.mxu0 0.0
      %540 = vmatprep.subr.mxu0 0.0
      %541 = vmatpush1.msra.mxu0 0.0
      %542 = vmatprep.subr.mxu0 0.0
      %543 = vmatpush1.msra.mxu0 0.0
      %544 = vmatprep.subr.mxu0 0.0
      %545 = vmatpush1.msra.mxu0 0.0
      %546 = vmatprep.subr.mxu0 0.0
      %547 = vmatpush1.msra.mxu0 0.0
      %548 = vmatprep.subr.mxu0 0.0
      %549 = vmatpush1.msra.mxu0 0.0
      %550 = vmatprep.subr.mxu0 0.0
      %551 = vmatpush1.msra.mxu0 0.0
      %552 = vmatprep.subr.mxu0 0.0
      %553 = vmatpush1.msra.mxu0 0.0
      %554 = vmatprep.subr.mxu0 0.0
      %555 = vmatpush1.msra.mxu0 0.0
      %556 = vmatprep.mubr.f32.mxu0 0.0
      %557 = vmatmul.mubr.f32.gmra.mrb[0].mxu0 %v413
      %v558 = vpop.f32.mrb[0].mxu0
      %v559 = vadd.f32 %v409, %v558
      %v560 = vpop.f32.mrb[0].mxu0
      %561 = vdwg.mxu0
      %s562 = scalar_lea.vmem %s1, 16
      %v563 = vld [vmem:[%s562] sm:$0xff]
      %564 = vrot.lane.b32.xlu0 %v239, 126
      %v565 = vpop.permute.xlu0 %564
      %566 = vrot.lane.b32.xlu0 %v246, 126
      %v567 = vpop.permute.xlu0 %566
      %568 = vrot.lane.b32.xlu0 %v240, 126
      %v569 = vpop.permute.xlu0 %568
      %570 = vrot.lane.b32.xlu0 %v247, 126
      %v571 = vpop.permute.xlu0 %570
      %vm572 = vcmask 1031168
      %v573 = vsel %vm572, %v565, %v567
      %v574 = vsel %vm572, %v567, %v569
      %v575 = vsel %vm572, %v569, %v571
      %v577 = vsel %vm260, %v563, 0
      %v579 = vsel %vm264, %v573, 0
      %v581 = vsel %vm264, %v574, 0
      %v583 = vsel %vm264, %v575, 0
      %585 = vmatprep.subr.mxu0 %v581
      %586 = vmatpush1.msra.mxu0 %v579
      %587 = vmatprep.subr.mxu0 0.0
      %588 = vmatpush1.msra.mxu0 0.0
      %589 = vmatprep.subr.mxu0 0.0
      %590 = vmatpush1.msra.mxu0 0.0
      %591 = vmatprep.subr.mxu0 0.0
      %592 = vmatpush1.msra.mxu0 0.0
      %593 = vmatprep.subr.mxu0 0.0
      %594 = vmatpush1.msra.mxu0 0.0
      %595 = vmatprep.subr.mxu0 0.0
      %596 = vmatpush1.msra.mxu0 0.0
      %597 = vmatprep.subr.mxu0 0.0
      %598 = vmatpush1.msra.mxu0 0.0
      %599 = vmatprep.subr.mxu0 0.0
      %600 = vmatpush1.msra.mxu0 0.0
      %601 = vmatprep.subr.mxu0 0.0
      %602 = vmatpush1.msra.mxu0 0.0
      %603 = vmatprep.subr.mxu0 0.0
      %604 = vmatpush1.msra.mxu0 0.0
      %605 = vmatprep.subr.mxu0 0.0
      %606 = vmatpush1.msra.mxu0 0.0
      %607 = vmatprep.subr.mxu0 0.0
      %608 = vmatpush1.msra.mxu0 0.0
      %609 = vmatprep.subr.mxu0 0.0
      %610 = vmatpush1.msra.mxu0 0.0
      %611 = vmatprep.subr.mxu0 0.0
      %612 = vmatpush1.msra.mxu0 0.0
      %613 = vmatprep.subr.mxu0 0.0
      %614 = vmatpush1.msra.mxu0 0.0
      %615 = vmatprep.subr.mxu0 0.0
      %616 = vmatpush1.msra.mxu0 0.0
      %617 = vmatprep.subr.mxu0 0.0
      %618 = vmatpush1.msra.mxu0 0.0
      %619 = vmatprep.subr.mxu0 0.0
      %620 = vmatpush1.msra.mxu0 0.0
      %621 = vmatprep.subr.mxu0 0.0
      %622 = vmatpush1.msra.mxu0 0.0
      %623 = vmatprep.subr.mxu0 0.0
      %624 = vmatpush1.msra.mxu0 0.0
      %625 = vmatprep.subr.mxu0 0.0
      %626 = vmatpush1.msra.mxu0 0.0
      %627 = vmatprep.subr.mxu0 0.0
      %628 = vmatpush1.msra.mxu0 0.0
      %629 = vmatprep.subr.mxu0 0.0
      %630 = vmatpush1.msra.mxu0 0.0
      %631 = vmatprep.subr.mxu0 0.0
      %632 = vmatpush1.msra.mxu0 0.0
      %633 = vmatprep.subr.mxu0 0.0
      %634 = vmatpush1.msra.mxu0 0.0
      %635 = vmatprep.subr.mxu0 0.0
      %636 = vmatpush1.msra.mxu0 0.0
      %637 = vmatprep.subr.mxu0 0.0
      %638 = vmatpush1.msra.mxu0 0.0
      %639 = vmatprep.subr.mxu0 0.0
      %640 = vmatpush1.msra.mxu0 0.0
      %641 = vmatprep.subr.mxu0 0.0
      %642 = vmatpush1.msra.mxu0 0.0
      %643 = vmatprep.subr.mxu0 0.0
      %644 = vmatpush1.msra.mxu0 0.0
      %645 = vmatprep.subr.mxu0 0.0
      %646 = vmatpush1.msra.mxu0 0.0
      %647 = vmatprep.subr.mxu0 0.0
      %648 = vmatpush1.msra.mxu0 0.0
      %649 = vmatprep.mubr.f32.mxu0 0.0
      %650 = vmatmul.mubr.f32.gmra.mrb[0].mxu0 %v577
      %v651 = vpop.f32.mrb[0].mxu0
      %v652 = vadd.f32 0.0, %v651
      %v653 = vpop.f32.mrb[0].mxu0
      %v654 = vadd.f32 0.0, %v653
      %655 = vdwg.mxu0
      %656 = vmatprep.subr.mxu0 0.0
      %657 = vmatpush1.msra.mxu0 %v583
      %658 = vmatprep.subr.mxu0 0.0
      %659 = vmatpush1.msra.mxu0 0.0
      %660 = vmatprep.subr.mxu0 0.0
      %661 = vmatpush1.msra.mxu0 0.0
      %662 = vmatprep.subr.mxu0 0.0
      %663 = vmatpush1.msra.mxu0 0.0
      %664 = vmatprep.subr.mxu0 0.0
      %665 = vmatpush1.msra.mxu0 0.0
      %666 = vmatprep.subr.mxu0 0.0
      %667 = vmatpush1.msra.mxu0 0.0
      %668 = vmatprep.subr.mxu0 0.0
      %669 = vmatpush1.msra.mxu0 0.0
      %670 = vmatprep.subr.mxu0 0.0
      %671 = vmatpush1.msra.mxu0 0.0
      %672 = vmatprep.subr.mxu0 0.0
      %673 = vmatpush1.msra.mxu0 0.0
      %674 = vmatprep.subr.mxu0 0.0
      %675 = vmatpush1.msra.mxu0 0.0
      %676 = vmatprep.subr.mxu0 0.0
      %677 = vmatpush1.msra.mxu0 0.0
      %678 = vmatprep.subr.mxu0 0.0
      %679 = vmatpush1.msra.mxu0 0.0
      %680 = vmatprep.subr.mxu0 0.0
      %681 = vmatpush1.msra.mxu0 0.0
      %682 = vmatprep.subr.mxu0 0.0
      %683 = vmatpush1.msra.mxu0 0.0
      %684 = vmatprep.subr.mxu0 0.0
      %685 = vmatpush1.msra.mxu0 0.0
      %686 = vmatprep.subr.mxu0 0.0
      %687 = vmatpush1.msra.mxu0 0.0
      %688 = vmatprep.subr.mxu0 0.0
      %689 = vmatpush1.msra.mxu0 0.0
      %690 = vmatprep.subr.mxu0 0.0
      %691 = vmatpush1.msra.mxu0 0.0
      %692 = vmatprep.subr.mxu0 0.0
      %693 = vmatpush1.msra.mxu0 0.0
      %694 = vmatprep.subr.mxu0 0.0
      %695 = vmatpush1.msra.mxu0 0.0
      %696 = vmatprep.subr.mxu0 0.0
      %697 = vmatpush1.msra.mxu0 0.0
      %698 = vmatprep.subr.mxu0 0.0
      %699 = vmatpush1.msra.mxu0 0.0
      %700 = vmatprep.subr.mxu0 0.0
      %701 = vmatpush1.msra.mxu0 0.0
      %702 = vmatprep.subr.mxu0 0.0
      %703 = vmatpush1.msra.mxu0 0.0
      %704 = vmatprep.subr.mxu0 0.0
      %705 = vmatpush1.msra.mxu0 0.0
      %706 = vmatprep.subr.mxu0 0.0
      %707 = vmatpush1.msra.mxu0 0.0
      %708 = vmatprep.subr.mxu0 0.0
      %709 = vmatpush1.msra.mxu0 0.0
      %710 = vmatprep.subr.mxu0 0.0
      %711 = vmatpush1.msra.mxu0 0.0
      %712 = vmatprep.subr.mxu0 0.0
      %713 = vmatpush1.msra.mxu0 0.0
      %714 = vmatprep.subr.mxu0 0.0
      %715 = vmatpush1.msra.mxu0 0.0
      %716 = vmatprep.subr.mxu0 0.0
      %717 = vmatpush1.msra.mxu0 0.0
      %718 = vmatprep.subr.mxu0 0.0
      %719 = vmatpush1.msra.mxu0 0.0
      %720 = vmatprep.mubr.f32.mxu0 0.0
      %721 = vmatmul.mubr.f32.gmra.mrb[0].mxu0 %v577
      %v722 = vpop.f32.mrb[0].mxu0
      %v723 = vadd.f32 0.0, %v722
      %v724 = vpop.f32.mrb[0].mxu0
      %725 = vdwg.mxu0
      %v726 = vadd.f32 %v488, %v652
      %v727 = vadd.f32 %v490, %v654
      %v728 = vadd.f32 %v559, %v723
      %s729 = scalar_lea.vmem %s1, 24
      %v730 = vld [vmem:[%s729] sm:$0xff]
      %731 = vrot.lane.b32.xlu0 %v239, 110
      %v732 = vpop.permute.xlu0 %731
      %733 = vrot.lane.b32.xlu0 %v246, 110
      %v734 = vpop.permute.xlu0 %733
      %735 = vrot.lane.b32.xlu0 %v240, 110
      %v736 = vpop.permute.xlu0 %735
      %737 = vrot.lane.b32.xlu0 %v247, 110
      %v738 = vpop.permute.xlu0 %737
      %vm739 = vcmask 900096
      %v740 = vsel %vm739, %v732, %v734
      %v741 = vsel %vm739, %v734, %v736
      %v742 = vsel %vm739, %v736, %v738
      %v744 = vsel %vm260, %v730, 0
      %v746 = vsel %vm264, %v740, 0
      %v748 = vsel %vm264, %v741, 0
      %v750 = vsel %vm264, %v742, 0
      %752 = vmatprep.subr.mxu0 %v748
      %753 = vmatpush1.msra.mxu0 %v746
      %754 = vmatprep.subr.mxu0 0.0
      %755 = vmatpush1.msra.mxu0 0.0
      %756 = vmatprep.subr.mxu0 0.0
      %757 = vmatpush1.msra.mxu0 0.0
      %758 = vmatprep.subr.mxu0 0.0
      %759 = vmatpush1.msra.mxu0 0.0
      %760 = vmatprep.subr.mxu0 0.0
      %761 = vmatpush1.msra.mxu0 0.0
      %762 = vmatprep.subr.mxu0 0.0
      %763 = vmatpush1.msra.mxu0 0.0
      %764 = vmatprep.subr.mxu0 0.0
      %765 = vmatpush1.msra.mxu0 0.0
      %766 = vmatprep.subr.mxu0 0.0
      %767 = vmatpush1.msra.mxu0 0.0
      %768 = vmatprep.subr.mxu0 0.0
      %769 = vmatpush1.msra.mxu0 0.0
      %770 = vmatprep.subr.mxu0 0.0
      %771 = vmatpush1.msra.mxu0 0.0
      %772 = vmatprep.subr.mxu0 0.0
      %773 = vmatpush1.msra.mxu0 0.0
      %774 = vmatprep.subr.mxu0 0.0
      %775 = vmatpush1.msra.mxu0 0.0
      %776 = vmatprep.subr.mxu0 0.0
      %777 = vmatpush1.msra.mxu0 0.0
      %778 = vmatprep.subr.mxu0 0.0
      %779 = vmatpush1.msra.mxu0 0.0
      %780 = vmatprep.subr.mxu0 0.0
      %781 = vmatpush1.msra.mxu0 0.0
      %782 = vmatprep.subr.mxu0 0.0
      %783 = vmatpush1.msra.mxu0 0.0
      %784 = vmatprep.subr.mxu0 0.0
      %785 = vmatpush1.msra.mxu0 0.0
      %786 = vmatprep.subr.mxu0 0.0
      %787 = vmatpush1.msra.mxu0 0.0
      %788 = vmatprep.subr.mxu0 0.0
      %789 = vmatpush1.msra.mxu0 0.0
      %790 = vmatprep.subr.mxu0 0.0
      %791 = vmatpush1.msra.mxu0 0.0
      %792 = vmatprep.subr.mxu0 0.0
      %793 = vmatpush1.msra.mxu0 0.0
      %794 = vmatprep.subr.mxu0 0.0
      %795 = vmatpush1.msra.mxu0 0.0
      %796 = vmatprep.subr.mxu0 0.0
      %797 = vmatpush1.msra.mxu0 0.0
      %798 = vmatprep.subr.mxu0 0.0
      %799 = vmatpush1.msra.mxu0 0.0
      %800 = vmatprep.subr.mxu0 0.0
      %801 = vmatpush1.msra.mxu0 0.0
      %802 = vmatprep.subr.mxu0 0.0
      %803 = vmatpush1.msra.mxu0 0.0
      %804 = vmatprep.subr.mxu0 0.0
      %805 = vmatpush1.msra.mxu0 0.0
      %806 = vmatprep.subr.mxu0 0.0
      %807 = vmatpush1.msra.mxu0 0.0
      %808 = vmatprep.subr.mxu0 0.0
      %809 = vmatpush1.msra.mxu0 0.0
      %810 = vmatprep.subr.mxu0 0.0
      %811 = vmatpush1.msra.mxu0 0.0
      %812 = vmatprep.subr.mxu0 0.0
      %813 = vmatpush1.msra.mxu0 0.0
      %814 = vmatprep.subr.mxu0 0.0
      %815 = vmatpush1.msra.mxu0 0.0
      %816 = vmatprep.mubr.f32.mxu0 0.0
      %817 = vmatmul.mubr.f32.gmra.mrb[0].mxu0 %v744
      %v818 = vpop.f32.mrb[0].mxu0
      %v819 = vadd.f32 0.0, %v818
      %v820 = vpop.f32.mrb[0].mxu0
      %v821 = vadd.f32 0.0, %v820
      %822 = vdwg.mxu0
      %823 = vmatprep.subr.mxu0 0.0
      %824 = vmatpush1.msra.mxu0 %v750
      %825 = vmatprep.subr.mxu0 0.0
      %826 = vmatpush1.msra.mxu0 0.0
      %827 = vmatprep.subr.mxu0 0.0
      %828 = vmatpush1.msra.mxu0 0.0
      %829 = vmatprep.subr.mxu0 0.0
      %830 = vmatpush1.msra.mxu0 0.0
      %831 = vmatprep.subr.mxu0 0.0
      %832 = vmatpush1.msra.mxu0 0.0
      %833 = vmatprep.subr.mxu0 0.0
      %834 = vmatpush1.msra.mxu0 0.0
      %835 = vmatprep.subr.mxu0 0.0
      %836 = vmatpush1.msra.mxu0 0.0
      %837 = vmatprep.subr.mxu0 0.0
      %838 = vmatpush1.msra.mxu0 0.0
      %839 = vmatprep.subr.mxu0 0.0
      %840 = vmatpush1.msra.mxu0 0.0
      %841 = vmatprep.subr.mxu0 0.0
      %842 = vmatpush1.msra.mxu0 0.0
      %843 = vmatprep.subr.mxu0 0.0
      %844 = vmatpush1.msra.mxu0 0.0
      %845 = vmatprep.subr.mxu0 0.0
      %846 = vmatpush1.msra.mxu0 0.0
      %847 = vmatprep.subr.mxu0 0.0
      %848 = vmatpush1.msra.mxu0 0.0
      %849 = vmatprep.subr.mxu0 0.0
      %850 = vmatpush1.msra.mxu0 0.0
      %851 = vmatprep.subr.mxu0 0.0
      %852 = vmatpush1.msra.mxu0 0.0
      %853 = vmatprep.subr.mxu0 0.0
      %854 = vmatpush1.msra.mxu0 0.0
      %855 = vmatprep.subr.mxu0 0.0
      %856 = vmatpush1.msra.mxu0 0.0
      %857 = vmatprep.subr.mxu0 0.0
      %858 = vmatpush1.msra.mxu0 0.0
      %859 = vmatprep.subr.mxu0 0.0
      %860 = vmatpush1.msra.mxu0 0.0
      %861 = vmatprep.subr.mxu0 0.0
      %862 = vmatpush1.msra.mxu0 0.0
      %863 = vmatprep.subr.mxu0 0.0
      %864 = vmatpush1.msra.mxu0 0.0
      %865 = vmatprep.subr.mxu0 0.0
      %866 = vmatpush1.msra.mxu0 0.0
      %867 = vmatprep.subr.mxu0 0.0
      %868 = vmatpush1.msra.mxu0 0.0
      %869 = vmatprep.subr.mxu0 0.0
      %870 = vmatpush1.msra.mxu0 0.0
      %871 = vmatprep.subr.mxu0 0.0
      %872 = vmatpush1.msra.mxu0 0.0
      %873 = vmatprep.subr.mxu0 0.0
      %874 = vmatpush1.msra.mxu0 0.0
      %875 = vmatprep.subr.mxu0 0.0
      %876 = vmatpush1.msra.mxu0 0.0
      %877 = vmatprep.subr.mxu0 0.0
      %878 = vmatpush1.msra.mxu0 0.0
      %879 = vmatprep.subr.mxu0 0.0
      %880 = vmatpush1.msra.mxu0 0.0
      %881 = vmatprep.subr.mxu0 0.0
      %882 = vmatpush1.msra.mxu0 0.0
      %883 = vmatprep.subr.mxu0 0.0
      %884 = vmatpush1.msra.mxu0 0.0
      %885 = vmatprep.subr.mxu0 0.0
      %886 = vmatpush1.msra.mxu0 0.0
      %887 = vmatprep.mubr.f32.mxu0 0.0
      %888 = vmatmul.mubr.f32.gmra.mrb[0].mxu0 %v744
      %v889 = vpop.f32.mrb[0].mxu0
      %v890 = vadd.f32 0.0, %v889
      %v891 = vpop.f32.mrb[0].mxu0
      %892 = vdwg.mxu0
      %v893 = vadd.f32 %v726, %v819
      %v894 = vadd.f32 %v727, %v821
      %v895 = vadd.f32 %v728, %v890
      %s896 = scalar_lea.vmem %s1, 32
      %v897 = vld [vmem:[%s896] sm:$0xff]
      %898 = vrot.lane.b32.xlu0 %v239, 109
      %v899 = vpop.permute.xlu0 %898
      %900 = vrot.lane.b32.xlu0 %v246, 109
      %v901 = vpop.permute.xlu0 %900
      %902 = vrot.lane.b32.xlu0 %v240, 109
      %v903 = vpop.permute.xlu0 %902
      %904 = vrot.lane.b32.xlu0 %v247, 109
      %v905 = vpop.permute.xlu0 %904
      %vm906 = vcmask 891904
      %v907 = vsel %vm906, %v899, %v901
      %v908 = vsel %vm906, %v901, %v903
      %v909 = vsel %vm906, %v903, %v905
      %v911 = vsel %vm260, %v897, 0
      %v913 = vsel %vm264, %v907, 0
      %v915 = vsel %vm264, %v908, 0
      %v917 = vsel %vm264, %v909, 0
      %919 = vmatprep.subr.mxu0 %v915
      %920 = vmatpush1.msra.mxu0 %v913
      %921 = vmatprep.subr.mxu0 0.0
      %922 = vmatpush1.msra.mxu0 0.0
      %923 = vmatprep.subr.mxu0 0.0
      %924 = vmatpush1.msra.mxu0 0.0
      %925 = vmatprep.subr.mxu0 0.0
      %926 = vmatpush1.msra.mxu0 0.0
      %927 = vmatprep.subr.mxu0 0.0
      %928 = vmatpush1.msra.mxu0 0.0
      %929 = vmatprep.subr.mxu0 0.0
      %930 = vmatpush1.msra.mxu0 0.0
      %931 = vmatprep.subr.mxu0 0.0
      %932 = vmatpush1.msra.mxu0 0.0
      %933 = vmatprep.subr.mxu0 0.0
      %934 = vmatpush1.msra.mxu0 0.0
      %935 = vmatprep.subr.mxu0 0.0
      %936 = vmatpush1.msra.mxu0 0.0
      %937 = vmatprep.subr.mxu0 0.0
      %938 = vmatpush1.msra.mxu0 0.0
      %939 = vmatprep.subr.mxu0 0.0
      %940 = vmatpush1.msra.mxu0 0.0
      %941 = vmatprep.subr.mxu0 0.0
      %942 = vmatpush1.msra.mxu0 0.0
      %943 = vmatprep.subr.mxu0 0.0
      %944 = vmatpush1.msra.mxu0 0.0
      %945 = vmatprep.subr.mxu0 0.0
      %946 = vmatpush1.msra.mxu0 0.0
      %947 = vmatprep.subr.mxu0 0.0
      %948 = vmatpush1.msra.mxu0 0.0
      %949 = vmatprep.subr.mxu0 0.0
      %950 = vmatpush1.msra.mxu0 0.0
      %951 = vmatprep.subr.mxu0 0.0
      %952 = vmatpush1.msra.mxu0 0.0
      %953 = vmatprep.subr.mxu0 0.0
      %954 = vmatpush1.msra.mxu0 0.0
      %955 = vmatprep.subr.mxu0 0.0
      %956 = vmatpush1.msra.mxu0 0.0
      %957 = vmatprep.subr.mxu0 0.0
      %958 = vmatpush1.msra.mxu0 0.0
      %959 = vmatprep.subr.mxu0 0.0
      %960 = vmatpush1.msra.mxu0 0.0
      %961 = vmatprep.subr.mxu0 0.0
      %962 = vmatpush1.msra.mxu0 0.0
      %963 = vmatprep.subr.mxu0 0.0
      %964 = vmatpush1.msra.mxu0 0.0
      %965 = vmatprep.subr.mxu0 0.0
      %966 = vmatpush1.msra.mxu0 0.0
      %967 = vmatprep.subr.mxu0 0.0
      %968 = vmatpush1.msra.mxu0 0.0
      %969 = vmatprep.subr.mxu0 0.0
      %970 = vmatpush1.msra.mxu0 0.0
      %971 = vmatprep.subr.mxu0 0.0
      %972 = vmatpush1.msra.mxu0 0.0
      %973 = vmatprep.subr.mxu0 0.0
      %974 = vmatpush1.msra.mxu0 0.0
      %975 = vmatprep.subr.mxu0 0.0
      %976 = vmatpush1.msra.mxu0 0.0
      %977 = vmatprep.subr.mxu0 0.0
      %978 = vmatpush1.msra.mxu0 0.0
      %979 = vmatprep.subr.mxu0 0.0
      %980 = vmatpush1.msra.mxu0 0.0
      %981 = vmatprep.subr.mxu0 0.0
      %982 = vmatpush1.msra.mxu0 0.0
      %983 = vmatprep.mubr.f32.mxu0 0.0
      %984 = vmatmul.mubr.f32.gmra.mrb[0].mxu0 %v911
      %v985 = vpop.f32.mrb[0].mxu0
      %v986 = vadd.f32 0.0, %v985
      %v987 = vpop.f32.mrb[0].mxu0
      %v988 = vadd.f32 0.0, %v987
      %989 = vdwg.mxu0
      %990 = vmatprep.subr.mxu0 0.0
      %991 = vmatpush1.msra.mxu0 %v917
      %992 = vmatprep.subr.mxu0 0.0
      %993 = vmatpush1.msra.mxu0 0.0
      %994 = vmatprep.subr.mxu0 0.0
      %995 = vmatpush1.msra.mxu0 0.0
      %996 = vmatprep.subr.mxu0 0.0
      %997 = vmatpush1.msra.mxu0 0.0
      %998 = vmatprep.subr.mxu0 0.0
      %999 = vmatpush1.msra.mxu0 0.0
      %1000 = vmatprep.subr.mxu0 0.0
      %1001 = vmatpush1.msra.mxu0 0.0
      %1002 = vmatprep.subr.mxu0 0.0
      %1003 = vmatpush1.msra.mxu0 0.0
      %1004 = vmatprep.subr.mxu0 0.0
      %1005 = vmatpush1.msra.mxu0 0.0
      %1006 = vmatprep.subr.mxu0 0.0
      %1007 = vmatpush1.msra.mxu0 0.0
      %1008 = vmatprep.subr.mxu0 0.0
      %1009 = vmatpush1.msra.mxu0 0.0
      %1010 = vmatprep.subr.mxu0 0.0
      %1011 = vmatpush1.msra.mxu0 0.0
      %1012 = vmatprep.subr.mxu0 0.0
      %1013 = vmatpush1.msra.mxu0 0.0
      %1014 = vmatprep.subr.mxu0 0.0
      %1015 = vmatpush1.msra.mxu0 0.0
      %1016 = vmatprep.subr.mxu0 0.0
      %1017 = vmatpush1.msra.mxu0 0.0
      %1018 = vmatprep.subr.mxu0 0.0
      %1019 = vmatpush1.msra.mxu0 0.0
      %1020 = vmatprep.subr.mxu0 0.0
      %1021 = vmatpush1.msra.mxu0 0.0
      %1022 = vmatprep.subr.mxu0 0.0
      %1023 = vmatpush1.msra.mxu0 0.0
      %1024 = vmatprep.subr.mxu0 0.0
      %1025 = vmatpush1.msra.mxu0 0.0
      %1026 = vmatprep.subr.mxu0 0.0
      %1027 = vmatpush1.msra.mxu0 0.0
      %1028 = vmatprep.subr.mxu0 0.0
      %1029 = vmatpush1.msra.mxu0 0.0
      %1030 = vmatprep.subr.mxu0 0.0
      %1031 = vmatpush1.msra.mxu0 0.0
      %1032 = vmatprep.subr.mxu0 0.0
      %1033 = vmatpush1.msra.mxu0 0.0
      %1034 = vmatprep.subr.mxu0 0.0
      %1035 = vmatpush1.msra.mxu0 0.0
      %1036 = vmatprep.subr.mxu0 0.0
      %1037 = vmatpush1.msra.mxu0 0.0
      %1038 = vmatprep.subr.mxu0 0.0
      %1039 = vmatpush1.msra.mxu0 0.0
      %1040 = vmatprep.subr.mxu0 0.0
      %1041 = vmatpush1.msra.mxu0 0.0
      %1042 = vmatprep.subr.mxu0 0.0
      %1043 = vmatpush1.msra.mxu0 0.0
      %1044 = vmatprep.subr.mxu0 0.0
      %1045 = vmatpush1.msra.mxu0 0.0
      %1046 = vmatprep.subr.mxu0 0.0
      %1047 = vmatpush1.msra.mxu0 0.0
      %1048 = vmatprep.subr.mxu0 0.0
      %1049 = vmatpush1.msra.mxu0 0.0
      %1050 = vmatprep.subr.mxu0 0.0
      %1051 = vmatpush1.msra.mxu0 0.0
      %1052 = vmatprep.subr.mxu0 0.0
      %1053 = vmatpush1.msra.mxu0 0.0
      %1054 = vmatprep.mubr.f32.mxu0 0.0
      %1055 = vmatmul.mubr.f32.gmra.mrb[0].mxu0 %v911
      %v1056 = vpop.f32.mrb[0].mxu0
      %v1057 = vadd.f32 0.0, %v1056
      %v1058 = vpop.f32.mrb[0].mxu0
      %1059 = vdwg.mxu0
      %v1060 = vadd.f32 %v893, %v986
      %v1061 = vadd.f32 %v894, %v988
      %v1062 = vadd.f32 %v895, %v1057
      %s1063 = scalar_lea.vmem %s1, 40
      %v1064 = vld [vmem:[%s1063] sm:$0xff]
      %1065 = vrot.lane.b32.xlu0 %v239, 108
      %v1066 = vpop.permute.xlu0 %1065
      %1067 = vrot.lane.b32.xlu0 %v246, 108
      %v1068 = vpop.permute.xlu0 %1067
      %1069 = vrot.lane.b32.xlu0 %v240, 108
      %v1070 = vpop.permute.xlu0 %1069
      %1071 = vrot.lane.b32.xlu0 %v247, 108
      %v1072 = vpop.permute.xlu0 %1071
      %vm1073 = vcmask 883712
      %v1074 = vsel %vm1073, %v1066, %v1068
      %v1075 = vsel %vm1073, %v1068, %v1070
      %v1076 = vsel %vm1073, %v1070, %v1072
      %v1078 = vsel %vm260, %v1064, 0
      %v1080 = vsel %vm264, %v1074, 0
      %v1082 = vsel %vm264, %v1075, 0
      %v1084 = vsel %vm264, %v1076, 0
      %1086 = vmatprep.subr.mxu0 %v1082
      %1087 = vmatpush1.msra.mxu0 %v1080
      %1088 = vmatprep.subr.mxu0 0.0
      %1089 = vmatpush1.msra.mxu0 0.0
      %1090 = vmatprep.subr.mxu0 0.0
      %1091 = vmatpush1.msra.mxu0 0.0
      %1092 = vmatprep.subr.mxu0 0.0
      %1093 = vmatpush1.msra.mxu0 0.0
      %1094 = vmatprep.subr.mxu0 0.0
      %1095 = vmatpush1.msra.mxu0 0.0
      %1096 = vmatprep.subr.mxu0 0.0
      %1097 = vmatpush1.msra.mxu0 0.0
      %1098 = vmatprep.subr.mxu0 0.0
      %1099 = vmatpush1.msra.mxu0 0.0
      %1100 = vmatprep.subr.mxu0 0.0
      %1101 = vmatpush1.msra.mxu0 0.0
      %1102 = vmatprep.subr.mxu0 0.0
      %1103 = vmatpush1.msra.mxu0 0.0
      %1104 = vmatprep.subr.mxu0 0.0
      %1105 = vmatpush1.msra.mxu0 0.0
      %1106 = vmatprep.subr.mxu0 0.0
      %1107 = vmatpush1.msra.mxu0 0.0
      %1108 = vmatprep.subr.mxu0 0.0
      %1109 = vmatpush1.msra.mxu0 0.0
      %1110 = vmatprep.subr.mxu0 0.0
      %1111 = vmatpush1.msra.mxu0 0.0
      %1112 = vmatprep.subr.mxu0 0.0
      %1113 = vmatpush1.msra.mxu0 0.0
      %1114 = vmatprep.subr.mxu0 0.0
      %1115 = vmatpush1.msra.mxu0 0.0
      %1116 = vmatprep.subr.mxu0 0.0
      %1117 = vmatpush1.msra.mxu0 0.0
      %1118 = vmatprep.subr.mxu0 0.0
      %1119 = vmatpush1.msra.mxu0 0.0
      %1120 = vmatprep.subr.mxu0 0.0
      %1121 = vmatpush1.msra.mxu0 0.0
      %1122 = vmatprep.subr.mxu0 0.0
      %1123 = vmatpush1.msra.mxu0 0.0
      %1124 = vmatprep.subr.mxu0 0.0
      %1125 = vmatpush1.msra.mxu0 0.0
      %1126 = vmatprep.subr.mxu0 0.0
      %1127 = vmatpush1.msra.mxu0 0.0
      %1128 = vmatprep.subr.mxu0 0.0
      %1129 = vmatpush1.msra.mxu0 0.0
      %1130 = vmatprep.subr.mxu0 0.0
      %1131 = vmatpush1.msra.mxu0 0.0
      %1132 = vmatprep.subr.mxu0 0.0
      %1133 = vmatpush1.msra.mxu0 0.0
      %1134 = vmatprep.subr.mxu0 0.0
      %1135 = vmatpush1.msra.mxu0 0.0
      %1136 = vmatprep.subr.mxu0 0.0
      %1137 = vmatpush1.msra.mxu0 0.0
      %1138 = vmatprep.subr.mxu0 0.0
      %1139 = vmatpush1.msra.mxu0 0.0
      %1140 = vmatprep.subr.mxu0 0.0
      %1141 = vmatpush1.msra.mxu0 0.0
      %1142 = vmatprep.subr.mxu0 0.0
      %1143 = vmatpush1.msra.mxu0 0.0
      %1144 = vmatprep.subr.mxu0 0.0
      %1145 = vmatpush1.msra.mxu0 0.0
      %1146 = vmatprep.subr.mxu0 0.0
      %1147 = vmatpush1.msra.mxu0 0.0
      %1148 = vmatprep.subr.mxu0 0.0
      %1149 = vmatpush1.msra.mxu0 0.0
      %1150 = vmatprep.mubr.f32.mxu0 0.0
      %1151 = vmatmul.mubr.f32.gmra.mrb[0].mxu0 %v1078
      %v1152 = vpop.f32.mrb[0].mxu0
      %v1153 = vadd.f32 0.0, %v1152
      %v1154 = vpop.f32.mrb[0].mxu0
      %v1155 = vadd.f32 0.0, %v1154
      %1156 = vdwg.mxu0
      %1157 = vmatprep.subr.mxu0 0.0
      %1158 = vmatpush1.msra.mxu0 %v1084
      %1159 = vmatprep.subr.mxu0 0.0
      %1160 = vmatpush1.msra.mxu0 0.0
      %1161 = vmatprep.subr.mxu0 0.0
      %1162 = vmatpush1.msra.mxu0 0.0
      %1163 = vmatprep.subr.mxu0 0.0
      %1164 = vmatpush1.msra.mxu0 0.0
      %1165 = vmatprep.subr.mxu0 0.0
      %1166 = vmatpush1.msra.mxu0 0.0
      %1167 = vmatprep.subr.mxu0 0.0
      %1168 = vmatpush1.msra.mxu0 0.0
      %1169 = vmatprep.subr.mxu0 0.0
      %1170 = vmatpush1.msra.mxu0 0.0
      %1171 = vmatprep.subr.mxu0 0.0
      %1172 = vmatpush1.msra.mxu0 0.0
      %1173 = vmatprep.subr.mxu0 0.0
      %1174 = vmatpush1.msra.mxu0 0.0
      %1175 = vmatprep.subr.mxu0 0.0
      %1176 = vmatpush1.msra.mxu0 0.0
      %1177 = vmatprep.subr.mxu0 0.0
      %1178 = vmatpush1.msra.mxu0 0.0
      %1179 = vmatprep.subr.mxu0 0.0
      %1180 = vmatpush1.msra.mxu0 0.0
      %1181 = vmatprep.subr.mxu0 0.0
      %1182 = vmatpush1.msra.mxu0 0.0
      %1183 = vmatprep.subr.mxu0 0.0
      %1184 = vmatpush1.msra.mxu0 0.0
      %1185 = vmatprep.subr.mxu0 0.0
      %1186 = vmatpush1.msra.mxu0 0.0
      %1187 = vmatprep.subr.mxu0 0.0
      %1188 = vmatpush1.msra.mxu0 0.0
      %1189 = vmatprep.subr.mxu0 0.0
      %1190 = vmatpush1.msra.mxu0 0.0
      %1191 = vmatprep.subr.mxu0 0.0
      %1192 = vmatpush1.msra.mxu0 0.0
      %1193 = vmatprep.subr.mxu0 0.0
      %1194 = vmatpush1.msra.mxu0 0.0
      %1195 = vmatprep.subr.mxu0 0.0
      %1196 = vmatpush1.msra.mxu0 0.0
      %1197 = vmatprep.subr.mxu0 0.0
      %1198 = vmatpush1.msra.mxu0 0.0
      %1199 = vmatprep.subr.mxu0 0.0
      %1200 = vmatpush1.msra.mxu0 0.0
      %1201 = vmatprep.subr.mxu0 0.0
      %1202 = vmatpush1.msra.mxu0 0.0
      %1203 = vmatprep.subr.mxu0 0.0
      %1204 = vmatpush1.msra.mxu0 0.0
      %1205 = vmatprep.subr.mxu0 0.0
      %1206 = vmatpush1.msra.mxu0 0.0
      %1207 = vmatprep.subr.mxu0 0.0
      %1208 = vmatpush1.msra.mxu0 0.0
      %1209 = vmatprep.subr.mxu0 0.0
      %1210 = vmatpush1.msra.mxu0 0.0
      %1211 = vmatprep.subr.mxu0 0.0
      %1212 = vmatpush1.msra.mxu0 0.0
      %1213 = vmatprep.subr.mxu0 0.0
      %1214 = vmatpush1.msra.mxu0 0.0
      %1215 = vmatprep.subr.mxu0 0.0
      %1216 = vmatpush1.msra.mxu0 0.0
      %1217 = vmatprep.subr.mxu0 0.0
      %1218 = vmatpush1.msra.mxu0 0.0
      %1219 = vmatprep.subr.mxu0 0.0
      %1220 = vmatpush1.msra.mxu0 0.0
      %1221 = vmatprep.mubr.f32.mxu0 0.0
      %1222 = vmatmul.mubr.f32.gmra.mrb[0].mxu0 %v1078
      %v1223 = vpop.f32.mrb[0].mxu0
      %v1224 = vadd.f32 0.0, %v1223
      %v1225 = vpop.f32.mrb[0].mxu0
      %1226 = vdwg.mxu0
      %v1227 = vadd.f32 %v1060, %v1153
      %v1228 = vadd.f32 %v1061, %v1155
      %v1229 = vadd.f32 %v1062, %v1224
      %s1230 = scalar_lea.vmem %s1, 48
      %v1231 = vld [vmem:[%s1230] sm:$0xff]
      %1232 = vrot.lane.b32.xlu0 %v239, 92
      %v1233 = vpop.permute.xlu0 %1232
      %1234 = vrot.lane.b32.xlu0 %v246, 92
      %v1235 = vpop.permute.xlu0 %1234
      %1236 = vrot.lane.b32.xlu0 %v240, 92
      %v1237 = vpop.permute.xlu0 %1236
      %1238 = vrot.lane.b32.xlu0 %v247, 92
      %v1239 = vpop.permute.xlu0 %1238
      %vm1240 = vcmask 752640
      %v1241 = vsel %vm1240, %v1233, %v1235
      %v1242 = vsel %vm1240, %v1235, %v1237
      %v1243 = vsel %vm1240, %v1237, %v1239
      %v1245 = vsel %vm260, %v1231, 0
      %v1247 = vsel %vm264, %v1241, 0
      %v1249 = vsel %vm264, %v1242, 0
      %v1251 = vsel %vm264, %v1243, 0
      %1253 = vmatprep.subr.mxu0 %v1249
      %1254 = vmatpush1.msra.mxu0 %v1247
      %1255 = vmatprep.subr.mxu0 0.0
      %1256 = vmatpush1.msra.mxu0 0.0
      %1257 = vmatprep.subr.mxu0 0.0
      %1258 = vmatpush1.msra.mxu0 0.0
      %1259 = vmatprep.subr.mxu0 0.0
      %1260 = vmatpush1.msra.mxu0 0.0
      %1261 = vmatprep.subr.mxu0 0.0
      %1262 = vmatpush1.msra.mxu0 0.0
      %1263 = vmatprep.subr.mxu0 0.0
      %1264 = vmatpush1.msra.mxu0 0.0
      %1265 = vmatprep.subr.mxu0 0.0
      %1266 = vmatpush1.msra.mxu0 0.0
      %1267 = vmatprep.subr.mxu0 0.0
      %1268 = vmatpush1.msra.mxu0 0.0
      %1269 = vmatprep.subr.mxu0 0.0
      %1270 = vmatpush1.msra.mxu0 0.0
      %1271 = vmatprep.subr.mxu0 0.0
      %1272 = vmatpush1.msra.mxu0 0.0
      %1273 = vmatprep.subr.mxu0 0.0
      %1274 = vmatpush1.msra.mxu0 0.0
      %1275 = vmatprep.subr.mxu0 0.0
      %1276 = vmatpush1.msra.mxu0 0.0
      %1277 = vmatprep.subr.mxu0 0.0
      %1278 = vmatpush1.msra.mxu0 0.0
      %1279 = vmatprep.subr.mxu0 0.0
      %1280 = vmatpush1.msra.mxu0 0.0
      %1281 = vmatprep.subr.mxu0 0.0
      %1282 = vmatpush1.msra.mxu0 0.0
      %1283 = vmatprep.subr.mxu0 0.0
      %1284 = vmatpush1.msra.mxu0 0.0
      %1285 = vmatprep.subr.mxu0 0.0
      %1286 = vmatpush1.msra.mxu0 0.0
      %1287 = vmatprep.subr.mxu0 0.0
      %1288 = vmatpush1.msra.mxu0 0.0
      %1289 = vmatprep.subr.mxu0 0.0
      %1290 = vmatpush1.msra.mxu0 0.0
      %1291 = vmatprep.subr.mxu0 0.0
      %1292 = vmatpush1.msra.mxu0 0.0
      %1293 = vmatprep.subr.mxu0 0.0
      %1294 = vmatpush1.msra.mxu0 0.0
      %1295 = vmatprep.subr.mxu0 0.0
      %1296 = vmatpush1.msra.mxu0 0.0
      %1297 = vmatprep.subr.mxu0 0.0
      %1298 = vmatpush1.msra.mxu0 0.0
      %1299 = vmatprep.subr.mxu0 0.0
      %1300 = vmatpush1.msra.mxu0 0.0
      %1301 = vmatprep.subr.mxu0 0.0
      %1302 = vmatpush1.msra.mxu0 0.0
      %1303 = vmatprep.subr.mxu0 0.0
      %1304 = vmatpush1.msra.mxu0 0.0
      %1305 = vmatprep.subr.mxu0 0.0
      %1306 = vmatpush1.msra.mxu0 0.0
      %1307 = vmatprep.subr.mxu0 0.0
      %1308 = vmatpush1.msra.mxu0 0.0
      %1309 = vmatprep.subr.mxu0 0.0
      %1310 = vmatpush1.msra.mxu0 0.0
      %1311 = vmatprep.subr.mxu0 0.0
      %1312 = vmatpush1.msra.mxu0 0.0
      %1313 = vmatprep.subr.mxu0 0.0
      %1314 = vmatpush1.msra.mxu0 0.0
      %1315 = vmatprep.subr.mxu0 0.0
      %1316 = vmatpush1.msra.mxu0 0.0
      %1317 = vmatprep.mubr.f32.mxu0 0.0
      %1318 = vmatmul.mubr.f32.gmra.mrb[0].mxu0 %v1245
      %v1319 = vpop.f32.mrb[0].mxu0
      %v1320 = vadd.f32 0.0, %v1319
      %v1321 = vpop.f32.mrb[0].mxu0
      %v1322 = vadd.f32 0.0, %v1321
      %1323 = vdwg.mxu0
      %1324 = vmatprep.subr.mxu0 0.0
      %1325 = vmatpush1.msra.mxu0 %v1251
      %1326 = vmatprep.subr.mxu0 0.0
      %1327 = vmatpush1.msra.mxu0 0.0
      %1328 = vmatprep.subr.mxu0 0.0
      %1329 = vmatpush1.msra.mxu0 0.0
      %1330 = vmatprep.subr.mxu0 0.0
      %1331 = vmatpush1.msra.mxu0 0.0
      %1332 = vmatprep.subr.mxu0 0.0
      %1333 = vmatpush1.msra.mxu0 0.0
      %1334 = vmatprep.subr.mxu0 0.0
      %1335 = vmatpush1.msra.mxu0 0.0
      %1336 = vmatprep.subr.mxu0 0.0
      %1337 = vmatpush1.msra.mxu0 0.0
      %1338 = vmatprep.subr.mxu0 0.0
      %1339 = vmatpush1.msra.mxu0 0.0
      %1340 = vmatprep.subr.mxu0 0.0
      %1341 = vmatpush1.msra.mxu0 0.0
      %1342 = vmatprep.subr.mxu0 0.0
      %1343 = vmatpush1.msra.mxu0 0.0
      %1344 = vmatprep.subr.mxu0 0.0
      %1345 = vmatpush1.msra.mxu0 0.0
      %1346 = vmatprep.subr.mxu0 0.0
      %1347 = vmatpush1.msra.mxu0 0.0
      %1348 = vmatprep.subr.mxu0 0.0
      %1349 = vmatpush1.msra.mxu0 0.0
      %1350 = vmatprep.subr.mxu0 0.0
      %1351 = vmatpush1.msra.mxu0 0.0
      %1352 = vmatprep.subr.mxu0 0.0
      %1353 = vmatpush1.msra.mxu0 0.0
      %1354 = vmatprep.subr.mxu0 0.0
      %1355 = vmatpush1.msra.mxu0 0.0
      %1356 = vmatprep.subr.mxu0 0.0
      %1357 = vmatpush1.msra.mxu0 0.0
      %1358 = vmatprep.subr.mxu0 0.0
      %1359 = vmatpush1.msra.mxu0 0.0
      %1360 = vmatprep.subr.mxu0 0.0
      %1361 = vmatpush1.msra.mxu0 0.0
      %1362 = vmatprep.subr.mxu0 0.0
      %1363 = vmatpush1.msra.mxu0 0.0
      %1364 = vmatprep.subr.mxu0 0.0
      %1365 = vmatpush1.msra.mxu0 0.0
      %1366 = vmatprep.subr.mxu0 0.0
      %1367 = vmatpush1.msra.mxu0 0.0
      %1368 = vmatprep.subr.mxu0 0.0
      %1369 = vmatpush1.msra.mxu0 0.0
      %1370 = vmatprep.subr.mxu0 0.0
      %1371 = vmatpush1.msra.mxu0 0.0
      %1372 = vmatprep.subr.mxu0 0.0
      %1373 = vmatpush1.msra.mxu0 0.0
      %1374 = vmatprep.subr.mxu0 0.0
      %1375 = vmatpush1.msra.mxu0 0.0
      %1376 = vmatprep.subr.mxu0 0.0
      %1377 = vmatpush1.msra.mxu0 0.0
      %1378 = vmatprep.subr.mxu0 0.0
      %1379 = vmatpush1.msra.mxu0 0.0
      %1380 = vmatprep.subr.mxu0 0.0
      %1381 = vmatpush1.msra.mxu0 0.0
      %1382 = vmatprep.subr.mxu0 0.0
      %1383 = vmatpush1.msra.mxu0 0.0
      %1384 = vmatprep.subr.mxu0 0.0
      %1385 = vmatpush1.msra.mxu0 0.0
      %1386 = vmatprep.subr.mxu0 0.0
      %1387 = vmatpush1.msra.mxu0 0.0
      %1388 = vmatprep.mubr.f32.mxu0 0.0
      %1389 = vmatmul.mubr.f32.gmra.mrb[0].mxu0 %v1245
      %v1390 = vpop.f32.mrb[0].mxu0
      %v1391 = vadd.f32 0.0, %v1390
      %v1392 = vpop.f32.mrb[0].mxu0
      %1393 = vdwg.mxu0
      %v1394 = vadd.f32 %v1227, %v1320
      %v1395 = vadd.f32 %v1228, %v1322
      %v1396 = vadd.f32 %v1229, %v1391
      %s1397 = scalar_lea.vmem %s1, 56
      %v1398 = vld [vmem:[%s1397] sm:$0xff]
      %1399 = vrot.lane.b32.xlu0 %v239, 91
      %v1400 = vpop.permute.xlu0 %1399
      %1401 = vrot.lane.b32.xlu0 %v246, 91
      %v1402 = vpop.permute.xlu0 %1401
      %1403 = vrot.lane.b32.xlu0 %v240, 91
      %v1404 = vpop.permute.xlu0 %1403
      %1405 = vrot.lane.b32.xlu0 %v247, 91
      %v1406 = vpop.permute.xlu0 %1405
      %vm1407 = vcmask 744448
      %v1408 = vsel %vm1407, %v1400, %v1402
      %v1409 = vsel %vm1407, %v1402, %v1404
      %v1410 = vsel %vm1407, %v1404, %v1406
      %v1412 = vsel %vm260, %v1398, 0
      %v1414 = vsel %vm264, %v1408, 0
      %v1416 = vsel %vm264, %v1409, 0
      %v1418 = vsel %vm264, %v1410, 0
      %1420 = vmatprep.subr.mxu0 %v1416
      %1421 = vmatpush1.msra.mxu0 %v1414
      %1422 = vmatprep.subr.mxu0 0.0
      %1423 = vmatpush1.msra.mxu0 0.0
      %1424 = vmatprep.subr.mxu0 0.0
      %1425 = vmatpush1.msra.mxu0 0.0
      %1426 = vmatprep.subr.mxu0 0.0
      %1427 = vmatpush1.msra.mxu0 0.0
      %1428 = vmatprep.subr.mxu0 0.0
      %1429 = vmatpush1.msra.mxu0 0.0
      %1430 = vmatprep.subr.mxu0 0.0
      %1431 = vmatpush1.msra.mxu0 0.0
      %1432 = vmatprep.subr.mxu0 0.0
      %1433 = vmatpush1.msra.mxu0 0.0
      %1434 = vmatprep.subr.mxu0 0.0
      %1435 = vmatpush1.msra.mxu0 0.0
      %1436 = vmatprep.subr.mxu0 0.0
      %1437 = vmatpush1.msra.mxu0 0.0
      %1438 = vmatprep.subr.mxu0 0.0
      %1439 = vmatpush1.msra.mxu0 0.0
      %1440 = vmatprep.subr.mxu0 0.0
      %1441 = vmatpush1.msra.mxu0 0.0
      %1442 = vmatprep.subr.mxu0 0.0
      %1443 = vmatpush1.msra.mxu0 0.0
      %1444 = vmatprep.subr.mxu0 0.0
      %1445 = vmatpush1.msra.mxu0 0.0
      %1446 = vmatprep.subr.mxu0 0.0
      %1447 = vmatpush1.msra.mxu0 0.0
      %1448 = vmatprep.subr.mxu0 0.0
      %1449 = vmatpush1.msra.mxu0 0.0
      %1450 = vmatprep.subr.mxu0 0.0
      %1451 = vmatpush1.msra.mxu0 0.0
      %1452 = vmatprep.subr.mxu0 0.0
      %1453 = vmatpush1.msra.mxu0 0.0
      %1454 = vmatprep.subr.mxu0 0.0
      %1455 = vmatpush1.msra.mxu0 0.0
      %1456 = vmatprep.subr.mxu0 0.0
      %1457 = vmatpush1.msra.mxu0 0.0
      %1458 = vmatprep.subr.mxu0 0.0
      %1459 = vmatpush1.msra.mxu0 0.0
      %1460 = vmatprep.subr.mxu0 0.0
      %1461 = vmatpush1.msra.mxu0 0.0
      %1462 = vmatprep.subr.mxu0 0.0
      %1463 = vmatpush1.msra.mxu0 0.0
      %1464 = vmatprep.subr.mxu0 0.0
      %1465 = vmatpush1.msra.mxu0 0.0
      %1466 = vmatprep.subr.mxu0 0.0
      %1467 = vmatpush1.msra.mxu0 0.0
      %1468 = vmatprep.subr.mxu0 0.0
      %1469 = vmatpush1.msra.mxu0 0.0
      %1470 = vmatprep.subr.mxu0 0.0
      %1471 = vmatpush1.msra.mxu0 0.0
      %1472 = vmatprep.subr.mxu0 0.0
      %1473 = vmatpush1.msra.mxu0 0.0
      %1474 = vmatprep.subr.mxu0 0.0
      %1475 = vmatpush1.msra.mxu0 0.0
      %1476 = vmatprep.subr.mxu0 0.0
      %1477 = vmatpush1.msra.mxu0 0.0
      %1478 = vmatprep.subr.mxu0 0.0
      %1479 = vmatpush1.msra.mxu0 0.0
      %1480 = vmatprep.subr.mxu0 0.0
      %1481 = vmatpush1.msra.mxu0 0.0
      %1482 = vmatprep.subr.mxu0 0.0
      %1483 = vmatpush1.msra.mxu0 0.0
      %1484 = vmatprep.mubr.f32.mxu0 0.0
      %1485 = vmatmul.mubr.f32.gmra.mrb[0].mxu0 %v1412
      %v1486 = vpop.f32.mrb[0].mxu0
      %v1487 = vadd.f32 0.0, %v1486
      %v1488 = vpop.f32.mrb[0].mxu0
      %v1489 = vadd.f32 0.0, %v1488
      %1490 = vdwg.mxu0
      %1491 = vmatprep.subr.mxu0 0.0
      %1492 = vmatpush1.msra.mxu0 %v1418
      %1493 = vmatprep.subr.mxu0 0.0
      %1494 = vmatpush1.msra.mxu0 0.0
      %1495 = vmatprep.subr.mxu0 0.0
      %1496 = vmatpush1.msra.mxu0 0.0
      %1497 = vmatprep.subr.mxu0 0.0
      %1498 = vmatpush1.msra.mxu0 0.0
      %1499 = vmatprep.subr.mxu0 0.0
      %1500 = vmatpush1.msra.mxu0 0.0
      %1501 = vmatprep.subr.mxu0 0.0
      %1502 = vmatpush1.msra.mxu0 0.0
      %1503 = vmatprep.subr.mxu0 0.0
      %1504 = vmatpush1.msra.mxu0 0.0
      %1505 = vmatprep.subr.mxu0 0.0
      %1506 = vmatpush1.msra.mxu0 0.0
      %1507 = vmatprep.subr.mxu0 0.0
      %1508 = vmatpush1.msra.mxu0 0.0
      %1509 = vmatprep.subr.mxu0 0.0
      %1510 = vmatpush1.msra.mxu0 0.0
      %1511 = vmatprep.subr.mxu0 0.0
      %1512 = vmatpush1.msra.mxu0 0.0
      %1513 = vmatprep.subr.mxu0 0.0
      %1514 = vmatpush1.msra.mxu0 0.0
      %1515 = vmatprep.subr.mxu0 0.0
      %1516 = vmatpush1.msra.mxu0 0.0
      %1517 = vmatprep.subr.mxu0 0.0
      %1518 = vmatpush1.msra.mxu0 0.0
      %1519 = vmatprep.subr.mxu0 0.0
      %1520 = vmatpush1.msra.mxu0 0.0
      %1521 = vmatprep.subr.mxu0 0.0
      %1522 = vmatpush1.msra.mxu0 0.0
      %1523 = vmatprep.subr.mxu0 0.0
      %1524 = vmatpush1.msra.mxu0 0.0
      %1525 = vmatprep.subr.mxu0 0.0
      %1526 = vmatpush1.msra.mxu0 0.0
      %1527 = vmatprep.subr.mxu0 0.0
      %1528 = vmatpush1.msra.mxu0 0.0
      %1529 = vmatprep.subr.mxu0 0.0
      %1530 = vmatpush1.msra.mxu0 0.0
      %1531 = vmatprep.subr.mxu0 0.0
      %1532 = vmatpush1.msra.mxu0 0.0
      %1533 = vmatprep.subr.mxu0 0.0
      %1534 = vmatpush1.msra.mxu0 0.0
      %1535 = vmatprep.subr.mxu0 0.0
      %1536 = vmatpush1.msra.mxu0 0.0
      %1537 = vmatprep.subr.mxu0 0.0
      %1538 = vmatpush1.msra.mxu0 0.0
      %1539 = vmatprep.subr.mxu0 0.0
      %1540 = vmatpush1.msra.mxu0 0.0
      %1541 = vmatprep.subr.mxu0 0.0
      %1542 = vmatpush1.msra.mxu0 0.0
      %1543 = vmatprep.subr.mxu0 0.0
      %1544 = vmatpush1.msra.mxu0 0.0
      %1545 = vmatprep.subr.mxu0 0.0
      %1546 = vmatpush1.msra.mxu0 0.0
      %1547 = vmatprep.subr.mxu0 0.0
      %1548 = vmatpush1.msra.mxu0 0.0
      %1549 = vmatprep.subr.mxu0 0.0
      %1550 = vmatpush1.msra.mxu0 0.0
      %1551 = vmatprep.subr.mxu0 0.0
      %1552 = vmatpush1.msra.mxu0 0.0
      %1553 = vmatprep.subr.mxu0 0.0
      %1554 = vmatpush1.msra.mxu0 0.0
      %1555 = vmatprep.mubr.f32.mxu0 0.0
      %1556 = vmatmul.mubr.f32.gmra.mrb[0].mxu0 %v1412
      %v1557 = vpop.f32.mrb[0].mxu0
      %v1558 = vadd.f32 0.0, %v1557
      %v1559 = vpop.f32.mrb[0].mxu0
      %1560 = vdwg.mxu0
      %v1561 = vadd.f32 %v1394, %v1487
      %v1562 = vadd.f32 %v1395, %v1489
      %v1563 = vadd.f32 %v1396, %v1558
      %s1564 = scalar_lea.vmem %s1, 64
      %v1565 = vld [vmem:[%s1564] sm:$0xff]
      %1566 = vrot.lane.b32.xlu0 %v239, 90
      %v1567 = vpop.permute.xlu0 %1566
      %1568 = vrot.lane.b32.xlu0 %v246, 90
      %v1569 = vpop.permute.xlu0 %1568
      %1570 = vrot.lane.b32.xlu0 %v240, 90
      %v1571 = vpop.permute.xlu0 %1570
      %1572 = vrot.lane.b32.xlu0 %v247, 90
      %v1573 = vpop.permute.xlu0 %1572
      %vm1574 = vcmask 736256
      %v1575 = vsel %vm1574, %v1567, %v1569
      %v1576 = vsel %vm1574, %v1569, %v1571
      %v1577 = vsel %vm1574, %v1571, %v1573
      %v1579 = vsel %vm260, %v1565, 0
      %v1581 = vsel %vm264, %v1575, 0
      %v1583 = vsel %vm264, %v1576, 0
      %v1585 = vsel %vm264, %v1577, 0
      %1587 = vmatprep.subr.mxu0 %v1583
      %1588 = vmatpush1.msra.mxu0 %v1581
      %1589 = vmatprep.subr.mxu0 0.0
      %1590 = vmatpush1.msra.mxu0 0.0
      %1591 = vmatprep.subr.mxu0 0.0
      %1592 = vmatpush1.msra.mxu0 0.0
      %1593 = vmatprep.subr.mxu0 0.0
      %1594 = vmatpush1.msra.mxu0 0.0
      %1595 = vmatprep.subr.mxu0 0.0
      %1596 = vmatpush1.msra.mxu0 0.0
      %1597 = vmatprep.subr.mxu0 0.0
      %1598 = vmatpush1.msra.mxu0 0.0
      %1599 = vmatprep.subr.mxu0 0.0
      %1600 = vmatpush1.msra.mxu0 0.0
      %1601 = vmatprep.subr.mxu0 0.0
      %1602 = vmatpush1.msra.mxu0 0.0
      %1603 = vmatprep.subr.mxu0 0.0
      %1604 = vmatpush1.msra.mxu0 0.0
      %1605 = vmatprep.subr.mxu0 0.0
      %1606 = vmatpush1.msra.mxu0 0.0
      %1607 = vmatprep.subr.mxu0 0.0
      %1608 = vmatpush1.msra.mxu0 0.0
      %1609 = vmatprep.subr.mxu0 0.0
      %1610 = vmatpush1.msra.mxu0 0.0
      %1611 = vmatprep.subr.mxu0 0.0
      %1612 = vmatpush1.msra.mxu0 0.0
      %1613 = vmatprep.subr.mxu0 0.0
      %1614 = vmatpush1.msra.mxu0 0.0
      %1615 = vmatprep.subr.mxu0 0.0
      %1616 = vmatpush1.msra.mxu0 0.0
      %1617 = vmatprep.subr.mxu0 0.0
      %1618 = vmatpush1.msra.mxu0 0.0
      %1619 = vmatprep.subr.mxu0 0.0
      %1620 = vmatpush1.msra.mxu0 0.0
      %1621 = vmatprep.subr.mxu0 0.0
      %1622 = vmatpush1.msra.mxu0 0.0
      %1623 = vmatprep.subr.mxu0 0.0
      %1624 = vmatpush1.msra.mxu0 0.0
      %1625 = vmatprep.subr.mxu0 0.0
      %1626 = vmatpush1.msra.mxu0 0.0
      %1627 = vmatprep.subr.mxu0 0.0
      %1628 = vmatpush1.msra.mxu0 0.0
      %1629 = vmatprep.subr.mxu0 0.0
      %1630 = vmatpush1.msra.mxu0 0.0
      %1631 = vmatprep.subr.mxu0 0.0
      %1632 = vmatpush1.msra.mxu0 0.0
      %1633 = vmatprep.subr.mxu0 0.0
      %1634 = vmatpush1.msra.mxu0 0.0
      %1635 = vmatprep.subr.mxu0 0.0
      %1636 = vmatpush1.msra.mxu0 0.0
      %1637 = vmatprep.subr.mxu0 0.0
      %1638 = vmatpush1.msra.mxu0 0.0
      %1639 = vmatprep.subr.mxu0 0.0
      %1640 = vmatpush1.msra.mxu0 0.0
      %1641 = vmatprep.subr.mxu0 0.0
      %1642 = vmatpush1.msra.mxu0 0.0
      %1643 = vmatprep.subr.mxu0 0.0
      %1644 = vmatpush1.msra.mxu0 0.0
      %1645 = vmatprep.subr.mxu0 0.0
      %1646 = vmatpush1.msra.mxu0 0.0
      %1647 = vmatprep.subr.mxu0 0.0
      %1648 = vmatpush1.msra.mxu0 0.0
      %1649 = vmatprep.subr.mxu0 0.0
      %1650 = vmatpush1.msra.mxu0 0.0
      %1651 = vmatprep.mubr.f32.mxu0 0.0
      %1652 = vmatmul.mubr.f32.gmra.mrb[0].mxu0 %v1579
      %v1653 = vpop.f32.mrb[0].mxu0
      %v1654 = vadd.f32 0.0, %v1653
      %v1655 = vpop.f32.mrb[0].mxu0
      %v1656 = vadd.f32 0.0, %v1655
      %1657 = vdwg.mxu0
      %1658 = vmatprep.subr.mxu0 0.0
      %1659 = vmatpush1.msra.mxu0 %v1585
      %1660 = vmatprep.subr.mxu0 0.0
      %1661 = vmatpush1.msra.mxu0 0.0
      %1662 = vmatprep.subr.mxu0 0.0
      %1663 = vmatpush1.msra.mxu0 0.0
      %1664 = vmatprep.subr.mxu0 0.0
      %1665 = vmatpush1.msra.mxu0 0.0
      %1666 = vmatprep.subr.mxu0 0.0
      %1667 = vmatpush1.msra.mxu0 0.0
      %1668 = vmatprep.subr.mxu0 0.0
      %1669 = vmatpush1.msra.mxu0 0.0
      %1670 = vmatprep.subr.mxu0 0.0
      %1671 = vmatpush1.msra.mxu0 0.0
      %1672 = vmatprep.subr.mxu0 0.0
      %1673 = vmatpush1.msra.mxu0 0.0
      %1674 = vmatprep.subr.mxu0 0.0
      %1675 = vmatpush1.msra.mxu0 0.0
      %1676 = vmatprep.subr.mxu0 0.0
      %1677 = vmatpush1.msra.mxu0 0.0
      %1678 = vmatprep.subr.mxu0 0.0
      %1679 = vmatpush1.msra.mxu0 0.0
      %1680 = vmatprep.subr.mxu0 0.0
      %1681 = vmatpush1.msra.mxu0 0.0
      %1682 = vmatprep.subr.mxu0 0.0
      %1683 = vmatpush1.msra.mxu0 0.0
      %1684 = vmatprep.subr.mxu0 0.0
      %1685 = vmatpush1.msra.mxu0 0.0
      %1686 = vmatprep.subr.mxu0 0.0
      %1687 = vmatpush1.msra.mxu0 0.0
      %1688 = vmatprep.subr.mxu0 0.0
      %1689 = vmatpush1.msra.mxu0 0.0
      %1690 = vmatprep.subr.mxu0 0.0
      %1691 = vmatpush1.msra.mxu0 0.0
      %1692 = vmatprep.subr.mxu0 0.0
      %1693 = vmatpush1.msra.mxu0 0.0
      %1694 = vmatprep.subr.mxu0 0.0
      %1695 = vmatpush1.msra.mxu0 0.0
      %1696 = vmatprep.subr.mxu0 0.0
      %1697 = vmatpush1.msra.mxu0 0.0
      %1698 = vmatprep.subr.mxu0 0.0
      %1699 = vmatpush1.msra.mxu0 0.0
      %1700 = vmatprep.subr.mxu0 0.0
      %1701 = vmatpush1.msra.mxu0 0.0
      %1702 = vmatprep.subr.mxu0 0.0
      %1703 = vmatpush1.msra.mxu0 0.0
      %1704 = vmatprep.subr.mxu0 0.0
      %1705 = vmatpush1.msra.mxu0 0.0
      %1706 = vmatprep.subr.mxu0 0.0
      %1707 = vmatpush1.msra.mxu0 0.0
      %1708 = vmatprep.subr.mxu0 0.0
      %1709 = vmatpush1.msra.mxu0 0.0
      %1710 = vmatprep.subr.mxu0 0.0
      %1711 = vmatpush1.msra.mxu0 0.0
      %1712 = vmatprep.subr.mxu0 0.0
      %1713 = vmatpush1.msra.mxu0 0.0
      %1714 = vmatprep.subr.mxu0 0.0
      %1715 = vmatpush1.msra.mxu0 0.0
      %1716 = vmatprep.subr.mxu0 0.0
      %1717 = vmatpush1.msra.mxu0 0.0
      %1718 = vmatprep.subr.mxu0 0.0
      %1719 = vmatpush1.msra.mxu0 0.0
      %1720 = vmatprep.subr.mxu0 0.0
      %1721 = vmatpush1.msra.mxu0 0.0
      %1722 = vmatprep.mubr.f32.mxu0 0.0
      %1723 = vmatmul.mubr.f32.gmra.mrb[0].mxu0 %v1579
      %v1724 = vpop.f32.mrb[0].mxu0
      %v1725 = vadd.f32 0.0, %v1724
      %v1726 = vpop.f32.mrb[0].mxu0
      %1727 = vdwg.mxu0
      %v1728 = vadd.f32 %v1561, %v1654
      %v1729 = vadd.f32 %v1562, %v1656
      %v1730 = vadd.f32 %v1563, %v1725
      %v1731 = vld [vmem:[%s211] sm:$0x7]
      // Predicated region
      $region37: #{new_conv_layer.1} parent=31 // pred_check
        %p1732 = pneg %p225
      $region38: #{new_conv_layer.1} parent=31 // pred_check_branch
        %1734 = sbr.rel (%p1732) target = $region40
      $region39: #{new_conv_layer.1} parent=31 // pred_region
        %v1735 = vld [vmem:[#allocation2] sm:$0xff]
        %v1737 = vlaneseq
        %v1738 = vshrl.u32 %v1737, 7
        %v1739 = vsub.s32 0, %v1738
        %v1740 = vrot.slane %v1731, %v1739
        %v1741 = vlaneseq
        %v1742 = vshrl.u32 %v1741, 7
        %v1743 = vsub.s32 1, %v1742
        %v1744 = vrot.slane %v1731, %v1743
        %v1745 = vlaneseq
        %v1746 = vshrl.u32 %v1745, 7
        %v1747 = vsub.s32 2, %v1746
        %v1748 = vrot.slane %v1731, %v1747
        %v1752 = vmul.f32 %v1728, %v1740
        %v1753 = vmul.f32 %v1729, %v1744
        %v1754 = vmul.f32 %v1730, %v1748
        %v1755 = vadd.f32 %v1752, %v1753
        %v1756 = vadd.f32 %v1755, %v1754
        %1757 = vadd.xlane.f32.xlu0 %v1756
        %v1758 = vpop.xlane.xlu0 %1757
        %v1759 = vadd.f32 %v1735, %v1758
        %vm1760 = vcmask 7168
        %1761 = vst.msk [vmem:[#allocation2] sm:$0xff] %vm1760, %v1759
        %v1762 = vld [vmem:[#allocation3] sm:$0xff]
        %v1763 = vmul.f32 %v1728, %v1728
        %v1764 = vmul.f32 %v1729, %v1729
        %v1765 = vmul.f32 %v1730, %v1730
        %v1766 = vmul.f32 %v1763, %v1740
        %v1767 = vmul.f32 %v1764, %v1744
        %v1768 = vmul.f32 %v1765, %v1748
        %v1769 = vadd.f32 %v1766, %v1767
        %v1770 = vadd.f32 %v1769, %v1768
        %1771 = vadd.xlane.f32.xlu0 %v1770
        %v1772 = vpop.xlane.xlu0 %1771
        %v1773 = vadd.f32 %v1762, %v1772
        %1774 = vst.msk [vmem:[#allocation3] sm:$0xff] %vm1760, %v1773
      $region40: #{new_conv_layer.1} parent=31 // pred_fallthru
        _
      %p1775 = scmp.eq.s32.totalorder %s20, 1
      // Predicated region
      $region41: #{new_conv_layer.1} parent=31 // pred_check
        %p1776 = pneg %p1775
      $region42: #{new_conv_layer.1} parent=31 // pred_check_branch
        %1778 = sbr.rel (%p1776) target = $region44
      $region43: #{new_conv_layer.1} parent=31 // pred_region
        %v1779 = vld [vmem:[#allocation2] sm:$0xff]
        %v1780 = vmul.f32 %v1779, 0.00390625
        %v1781 = vld [vmem:[#allocation3] sm:$0xff]
        %v1782 = vmul.f32 %v1781, 0.00390625
        %v1783 = vmul.f32 %v1780, %v1780
        %v1784 = vsub.f32 %v1782, %v1783
        %v1785 = vadd.f32 %v1784, 1e-05
        %v1786 = vrsqrt.pop %v1785
        %1788 = vset.pattern.permute.xlu0 0
        %1789 = vperm.xlu0 %1788, %v1780
        %v1790 = vpop.permute.xlu0 %1789
        %v1792 = vsub.f32 %v1728, %v1790
        %v1793 = vsub.f32 %v1729, %v1790
        %v1794 = vsub.f32 %v1730, %v1790
        %1796 = vset.pattern.permute.xlu0 0
        %1797 = vperm.xlu0 %1796, %v1786
        %v1798 = vpop.permute.xlu0 %1797
        %v1800 = vmul.f32 %v1792, %v1798
        %v1801 = vmul.f32 %v1793, %v1798
        %v1802 = vmul.f32 %v1794, %v1798
        %vm1803 = vcmp.ge.f32.partialorder %v1800, 0.0
        %vm1804 = vcmp.ge.f32.partialorder %v1801, 0.0
        %vm1805 = vcmp.ge.f32.partialorder %v1802, 0.0
        %v1806 = vmul.f32 %v1800, 0.2
        %v1807 = vmul.f32 %v1801, 0.2
        %v1808 = vmul.f32 %v1802, 0.2
        %v1809 = vsel %vm1803, %v1800, %v1806
        %v1810 = vsel %vm1804, %v1801, %v1807
        %v1811 = vsel %vm1805, %v1802, %v1808
        %1812 = vst [vmem:[%s222] sm:$0xff] %v1809
        %1813 = vst [vmem:[%s222 + $0x8] sm:$0xff] %v1810
        %1814 = vst [vmem:[%s222 + $0x10] sm:$0xff] %v1811
      $region44: #{new_conv_layer.1} parent=31 // pred_fallthru
        _
      %s1815 = smul.u32 %s20, %s21
      %s1816 = smul.u32 3, %s1815
      %p1817 = scmp.lt.s32.totalorder %s19, 1
      %s1818 = scalar_select %p1817, %s19, 1
      %p1819 = scmp.lt.s32.totalorder %s1816, 2
      %s1820 = scalar_select %p1819, %s1816, 2
      %s1821 = smul.addr %s1818, 3
      %s1822 = sadd.s32 %s1820, %s1821
      %s1823 = smul.addr %s1822, 8
      %s1824 = scalar_lea.vmem %s3, %s1823
      // Predicated region
      $region45: #{new_conv_layer.1} parent=31 // pred_check
        %p1825 = pneg %p128
      $region46: #{new_conv_layer.1} parent=31 // pred_check_branch
        %1827 = sbr.rel (%p1825) target = $region48
      $region47: #{new_conv_layer.1} parent=31 // pred_region
        %s1828 = smul.u32 %s20, %s21
        %s1829 = smul.u32 3, %s1828
      $region48: #{new_conv_layer.1} parent=31 // pred_fallthru
        _
    $region32: #{new_conv_layer.1} parent=5 // pred_fallthru
      _
    %p1830 = scmp.le.s32.totalorder 2, %s9
    // Predicated region
    $region49: #{new_conv_layer.1} parent=5 // pred_check
      %p1831 = pneg %p1830
    $region50: #{new_conv_layer.1} parent=5 // pred_check_branch
      %1833 = sbr.rel (%p1831) target = $region52
    $region51: #{new_conv_layer.1} parent=5 // pred_region
      %s1834 = ssub.s32 %s9, 2
      // Predicated region
      $region53: #{new_conv_layer.1} parent=51 // pred_check
        %p1835 = pneg %p134
      $region54: #{new_conv_layer.1} parent=51 // pred_check_branch
        %1837 = sbr.rel (%p1835) target = $region56
      $region55: #{new_conv_layer.1} parent=51 // pred_region
        %s1838 = smul.u32 %s23, %s24
        %s1839 = smul.u32 3, %s1838
        %p1840 = scmp.lt.s32.totalorder %s22, 1
        %s1841 = scalar_select %p1840, %s22, 1
        %p1842 = scmp.lt.s32.totalorder %s1839, 2
        %s1843 = scalar_select %p1842, %s1839, 2
        %s1844 = smul.addr %s1841, 3
        %s1845 = sadd.s32 %s1843, %s1844
        %s1846 = smul.addr %s1845, 8
        %s1847 = scalar_lea.vmem %s3, %s1846
      $region56: #{new_conv_layer.1} parent=51 // pred_fallthru
        _
    $region52: #{new_conv_layer.1} parent=5 // pred_fallthru
      _
  $region6: #{new_conv_layer.1} parent=0 // loop_footer
    %s13 = sadd.s32 1, %s9
  $region7: #{new_conv_layer.1} parent=0 // loop_footer_branch
    %8 = sbr.rel target = $region3
  $region8: #{new_conv_layer.1} parent=0 // loop_exit
    _

</llo_original>
